<compile_context>
chip_gen: v7x
topology: tpu7x:2x2x1
jax: 0.10.0
libtpu: 0.0.40
codegen_flags: <defaults>
</compile_context>

<pallas_src>
import jax
import jax.numpy as jnp
from jax.experimental import pallas as pl
from jax.experimental.pallas import tpu as pltpu


def _gated_pointwise_conv_kernel(gate_ref, x_ref, w_ref, o_ref):
    # gate_ref: (1, C_in)      pre-sigmoid SE gate, lane-dense (C_in on lanes)
    # x_ref:    (C_in, HW)     this sample's features (channels on sublanes)
    # w_ref:    (C_out, C_in)  1x1 conv weight, f32, VMEM-resident across the grid
    # o_ref:    (C_out, HW)
    #
    # Fold the per-channel gate into the weight rows instead of the activations:
    #   W @ diag(sigmoid(g)) @ x  ==  (W * sigmoid(g)_row) @ x
    # The (1, C_in) gate broadcasts over C_out rows as a natural lane-aligned
    # sublane broadcast (no (C_in, 1) column block, no transpose).
    g = jax.nn.sigmoid(gate_ref[...].astype(jnp.float32))   # (1, C_in), f32 on EUP/VPU
    wg = w_ref[...] * g                                      # (C_out, C_in), f32 VPU
    o_ref[...] = jnp.dot(
        wg, x_ref[...],
        preferred_element_type=jnp.float32,                  # f32 MXU, f32 accumulation
    ).astype(o_ref.dtype)


@jax.jit
def gated_pointwise_conv(x315, x311, weight):
    """
    x315:   (N, C_in, 1, 1)       gate logits
    x311:   (N, C_in, H, W)       feature map
    weight: (C_out, C_in, 1, 1)   PyTorch Conv2d weight layout (f32, no per-call cast)
    returns (N, C_out, H, W)
    """
    N, C_in, H, W = x311.shape
    C_out = weight.shape[0]
    HW = H * W

    # Free, transpose-less layout plumbing (row-major contiguity preserved).
    gate = x315.reshape(N, 1, C_in)      # lane-dense gate row
    x = x311.reshape(N, C_in, HW)
    w = weight.reshape(C_out, C_in)      # stays f32 — no un-fusable convert traffic

    cost = pl.CostEstimate(
        flops=2 * N * C_out * C_in * HW + N * C_out * C_in,
        transcendentals=N * C_in,
        bytes_accessed=4 * (gate.size + x.size + w.size + N * C_out * HW),
    )

    if N == 1:
        # Grid-less single invocation: full-array blocks, no grid-step bookkeeping.
        out = pl.pallas_call(
            _gated_pointwise_conv_kernel,
            out_shape=jax.ShapeDtypeStruct((C_out, HW), x311.dtype),
            in_specs=[
                pl.BlockSpec((1, C_in), lambda: (0, 0)),
                pl.BlockSpec((C_in, HW), lambda: (0, 0)),
                pl.BlockSpec((C_out, C_in), lambda: (0, 0)),
            ],
            out_specs=pl.BlockSpec((C_out, HW), lambda: (0, 0)),
            cost_estimate=cost,
        )(gate.reshape(1, C_in), x.reshape(C_in, HW), w)
        return out.reshape(N, C_out, H, W)

    # Batched path: one pallas_call, weight DMA'd once and VMEM-resident across n.
    out = pl.pallas_call(
        _gated_pointwise_conv_kernel,
        out_shape=jax.ShapeDtypeStruct((N, C_out, HW), x311.dtype),
        grid=(N,),
        in_specs=[
            pl.BlockSpec((None, 1, C_in), lambda n: (n, 0, 0)),    # per-sample gate row
            pl.BlockSpec((None, C_in, HW), lambda n: (n, 0, 0)),   # per-sample features
            pl.BlockSpec((C_out, C_in), lambda n: (0, 0)),         # weight: resident
        ],
        out_specs=pl.BlockSpec((None, C_out, HW), lambda n: (n, 0, 0)),
        compiler_params=pltpu.CompilerParams(
            dimension_semantics=("parallel",),
        ),
        cost_estimate=cost,
    )(gate, x, w)
    return out.reshape(N, C_out, H, W)


def _reference(x315, x311, weight):
    g = jax.nn.sigmoid(x315)
    x = g * x311
    w = weight.reshape(weight.shape[0], weight.shape[1])
    return jnp.einsum('nchw,oc->nohw', x, w, precision=jax.lax.Precision.HIGHEST)


if __name__ == "__main__":
    key = jax.random.PRNGKey(0)
    k1, k2, k3 = jax.random.split(key, 3)

    # Shapes implied by the module: x311 (1,1152,7,7), x315 (1,1152,1,1), W (192,1152,1,1)
    N, C_in, H, W = 1, 1152, 7, 7
    C_out = 192

    x311 = jax.random.normal(k1, (N, C_in, H, W), dtype=jnp.float32)
    x315 = jax.random.normal(k2, (N, C_in, 1, 1), dtype=jnp.float32)
    weight = jax.random.normal(k3, (C_out, C_in, 1, 1), dtype=jnp.float32) * (1.0 / (C_in ** 0.5))

    out = jax.block_until_ready(gated_pointwise_conv(x315, x311, weight))
    ref = _reference(x315, x311, weight)
    assert out.shape == (N, C_out, H, W), out.shape
    max_err = float(jnp.max(jnp.abs(out - ref)))
    # f32 end-to-end now; tolerance covers MXU f32-pass rounding vs HIGHEST reference.
    assert jnp.allclose(out, ref, atol=5e-3, rtol=5e-3), f"mismatch vs reference, max_err={max_err}"

    # Also exercise the batched (grid) path once.
    N2 = 2
    x311b = jax.random.normal(k1, (N2, C_in, H, W), dtype=jnp.float32)
    x315b = jax.random.normal(k2, (N2, C_in, 1, 1), dtype=jnp.float32)
    outb = jax.block_until_ready(gated_pointwise_conv(x315b, x311b, weight))
    refb = _reference(x315b, x311b, weight)
    max_err_b = float(jnp.max(jnp.abs(outb - refb)))
    assert jnp.allclose(outb, refb, atol=5e-3, rtol=5e-3), f"batched mismatch, max_err={max_err_b}"

    print("KERNEL_OK")
</pallas_src>

<mosaic_0001>
module attributes {stable_mosaic.version = 11 : i64} {
  func.func @_gated_pointwise_conv_kernel(%arg0: memref<1x1152xf32, #tpu.memory_space<vmem>>, %arg1: memref<1152x49xf32, #tpu.memory_space<vmem>>, %arg2: memref<192x1152xf32, #tpu.memory_space<vmem>>, %arg3: memref<192x49xf32, #tpu.memory_space<vmem>>) attributes {dimension_semantics = [], scalar_prefetch = 0 : i64, scratch_operands = 0 : i64, tpu.core_type = #tpu.core_type<tc>} {
    %c0 = arith.constant 0 : index
    %c0_0 = arith.constant 0 : index
    %0 = vector.load %arg0[%c0, %c0_0] : memref<1x1152xf32, #tpu.memory_space<vmem>>, vector<1x1152xf32>
    %1 = arith.negf %0 : vector<1x1152xf32>
    %2 = math.exp %1 : vector<1x1152xf32>
    %cst = arith.constant 1.000000e+00 : f32
    %3 = vector.broadcast %cst : f32 to vector<1x1152xf32>
    %4 = arith.addf %3, %2 : vector<1x1152xf32>
    %5 = arith.divf %3, %4 : vector<1x1152xf32>
    %c0_1 = arith.constant 0 : index
    %c0_2 = arith.constant 0 : index
    %6 = vector.load %arg2[%c0_1, %c0_2] : memref<192x1152xf32, #tpu.memory_space<vmem>>, vector<192x1152xf32>
    %7 = vector.broadcast %5 : vector<1x1152xf32> to vector<192x1152xf32>
    %8 = arith.mulf %6, %7 : vector<192x1152xf32>
    %c0_3 = arith.constant 0 : index
    %c0_4 = arith.constant 0 : index
    %9 = vector.load %arg1[%c0_3, %c0_4] : memref<1152x49xf32, #tpu.memory_space<vmem>>, vector<1152x49xf32>
    %cst_5 = arith.constant dense<0.000000e+00> : vector<192x49xf32>
    %10 = tpu.matmul %8, %9, %cst_5 {dimension_numbers = #tpu.dot_dimension_numbers<[1], [0], [0], [1], [0, 0, 1, 1], [], []>} : vector<192x1152xf32>, vector<1152x49xf32>, vector<192x49xf32> -> vector<192x49xf32>
    %c0_6 = arith.constant 0 : index
    %c0_7 = arith.constant 0 : index
    %11 = vector.load %arg3[%c0_6, %c0_7] : memref<192x49xf32, #tpu.memory_space<vmem>>, vector<192x49xf32>
    tpu.vector_store %arg3[%c0_6, %c0_7], %10 {strides = array<i32>} : memref<192x49xf32, #tpu.memory_space<vmem>>, vector<192x49xf32>,
    return
  }
}

</mosaic_0001>

<llo_original>
// kernel: gated_pointwise_conv.1
$region0: #{gated_pointwise_conv.1}
  #allocation0 [shape = 'u32[]', space=smem, size = 0x4, offset = 0x4, fixed_abs, tag = 'smem constant byte address 0x4 - core index']
  #allocation1 [shape = 'u32[144,128]{1,0:T(1,128)}', space=vmem, size = 0x12000, scoped, tag = 'internal scratch']
  %s0 = inlined_call_operand.vmem [shape: f32[1,1152], index: 0, kind: input, shape index: {}]
  %s1 = inlined_call_operand.vmem [shape: f32[1152,49], index: 1, kind: input, shape index: {}]
  %s2 = inlined_call_operand.vmem [shape: f32[192,1152], index: 2, kind: input, shape index: {}]
  %s3 = inlined_call_operand.vmem [shape: f32[192,49], index: 3, kind: output, shape index: {}]
  %s4 = sld [smem:[#allocation0]]
  $region22: #{gated_pointwise_conv.1} parent=0
    _
  %s6 = ssub.s32 1, %s4
  %s7 = scalar_select 0, %s6, %s4
  // Predicated region
  $region2: #{gated_pointwise_conv.1} parent=0 // pred_check
    _
  $region3: #{gated_pointwise_conv.1} parent=0 // pred_check_branch
    %9 = sbr.rel (0) target = $region5
  $region4: #{gated_pointwise_conv.1} parent=0 // pred_region
    _
  $region5: #{gated_pointwise_conv.1} parent=0 // pred_fallthru
    _
  // Predicated region
  $region6: #{gated_pointwise_conv.1} parent=0 // pred_check
    _
  $region7: #{gated_pointwise_conv.1} parent=0 // pred_check_branch
    %11 = sbr.rel (0) target = $region9
  $region8: #{gated_pointwise_conv.1} parent=0 // pred_region
    _
  $region9: #{gated_pointwise_conv.1} parent=0 // pred_fallthru
    _
  // Predicated region
  $region10: #{gated_pointwise_conv.1} parent=0 // pred_check
    _
  $region11: #{gated_pointwise_conv.1} parent=0 // pred_check_branch
    %13 = sbr.rel (0) target = $region13
  $region12: #{gated_pointwise_conv.1} parent=0 // pred_region
    _
  $region13: #{gated_pointwise_conv.1} parent=0 // pred_fallthru
    _
  %v14 = vld [vmem:[%s0] sm:$0xff]
  %v15 = vld [vmem:[%s0 + $0x8] sm:$0x1]
  %v16 = vxor.u32 %v14, 2147483648
  %v17 = vxor.u32 %v15, 2147483648
  %v18 = vmul.f32 %v16, 1.442695
  %v19 = vpow.pop %v18
  %v20 = vmul.f32 %v17, 1.442695
  %v21 = vpow.pop %v20
  %v22 = vadd.f32 %v19, 1.0
  %v23 = vadd.f32 %v21, 1.0
  %v24 = vrcp.pop %v22
  %v25 = vmul.f32 1.0, %v24
  %v26 = vrcp.pop %v23
  %v27 = vmul.f32 1.0, %v26
  %v28 = vld [vmem:[%s2] sm:$0xff]
  %v29 = vld [vmem:[%s2 + $0x8] sm:$0xff]
  %v30 = vld [vmem:[%s2 + $0x10] sm:$0xff]
  %v31 = vld [vmem:[%s2 + $0x18] sm:$0xff]
  %v32 = vld [vmem:[%s2 + $0x20] sm:$0xff]
  %v33 = vld [vmem:[%s2 + $0x28] sm:$0xff]
  %v34 = vld [vmem:[%s2 + $0x30] sm:$0xff]
  %v35 = vld [vmem:[%s2 + $0x38] sm:$0xff]
  %v36 = vld [vmem:[%s2 + $0x40] sm:$0xff]
  %v37 = vld [vmem:[%s2 + $0x48] sm:$0xff]
  %v38 = vld [vmem:[%s2 + $0x50] sm:$0xff]
  %v39 = vld [vmem:[%s2 + $0x58] sm:$0xff]
  %v40 = vld [vmem:[%s2 + $0x60] sm:$0xff]
  %v41 = vld [vmem:[%s2 + $0x68] sm:$0xff]
  %v42 = vld [vmem:[%s2 + $0x70] sm:$0xff]
  %v43 = vld [vmem:[%s2 + $0x78] sm:$0xff]
  %v44 = vld [vmem:[%s2 + $0x80] sm:$0xff]
  %v45 = vld [vmem:[%s2 + $0x88] sm:$0xff]
  %v46 = vld [vmem:[%s2 + $0x90] sm:$0xff]
  %v47 = vld [vmem:[%s2 + $0x98] sm:$0xff]
  %v48 = vld [vmem:[%s2 + $0xa0] sm:$0xff]
  %v49 = vld [vmem:[%s2 + $0xa8] sm:$0xff]
  %v50 = vld [vmem:[%s2 + $0xb0] sm:$0xff]
  %v51 = vld [vmem:[%s2 + $0xb8] sm:$0xff]
  %v52 = vld [vmem:[%s2 + $0xc0] sm:$0xff]
  %v53 = vld [vmem:[%s2 + $0xc8] sm:$0xff]
  %v54 = vld [vmem:[%s2 + $0xd0] sm:$0xff]
  %v55 = vld [vmem:[%s2 + $0xd8] sm:$0xff]
  %v56 = vld [vmem:[%s2 + $0xe0] sm:$0xff]
  %v57 = vld [vmem:[%s2 + $0xe8] sm:$0xff]
  %v58 = vld [vmem:[%s2 + $0xf0] sm:$0xff]
  %v59 = vld [vmem:[%s2 + $0xf8] sm:$0xff]
  %v60 = vld [vmem:[%s2 + $0x100] sm:$0xff]
  %v61 = vld [vmem:[%s2 + $0x108] sm:$0xff]
  %v62 = vld [vmem:[%s2 + $0x110] sm:$0xff]
  %v63 = vld [vmem:[%s2 + $0x118] sm:$0xff]
  %v64 = vld [vmem:[%s2 + $0x120] sm:$0xff]
  %v65 = vld [vmem:[%s2 + $0x128] sm:$0xff]
  %v66 = vld [vmem:[%s2 + $0x130] sm:$0xff]
  %v67 = vld [vmem:[%s2 + $0x138] sm:$0xff]
  %v68 = vld [vmem:[%s2 + $0x140] sm:$0xff]
  %v69 = vld [vmem:[%s2 + $0x148] sm:$0xff]
  %v70 = vld [vmem:[%s2 + $0x150] sm:$0xff]
  %v71 = vld [vmem:[%s2 + $0x158] sm:$0xff]
  %v72 = vld [vmem:[%s2 + $0x160] sm:$0xff]
  %v73 = vld [vmem:[%s2 + $0x168] sm:$0xff]
  %v74 = vld [vmem:[%s2 + $0x170] sm:$0xff]
  %v75 = vld [vmem:[%s2 + $0x178] sm:$0xff]
  %v76 = vld [vmem:[%s2 + $0x180] sm:$0xff]
  %v77 = vld [vmem:[%s2 + $0x188] sm:$0xff]
  %v78 = vld [vmem:[%s2 + $0x190] sm:$0xff]
  %v79 = vld [vmem:[%s2 + $0x198] sm:$0xff]
  %v80 = vld [vmem:[%s2 + $0x1a0] sm:$0xff]
  %v81 = vld [vmem:[%s2 + $0x1a8] sm:$0xff]
  %v82 = vld [vmem:[%s2 + $0x1b0] sm:$0xff]
  %v83 = vld [vmem:[%s2 + $0x1b8] sm:$0xff]
  %v84 = vld [vmem:[%s2 + $0x1c0] sm:$0xff]
  %v85 = vld [vmem:[%s2 + $0x1c8] sm:$0xff]
  %v86 = vld [vmem:[%s2 + $0x1d0] sm:$0xff]
  %v87 = vld [vmem:[%s2 + $0x1d8] sm:$0xff]
  %v88 = vld [vmem:[%s2 + $0x1e0] sm:$0xff]
  %v89 = vld [vmem:[%s2 + $0x1e8] sm:$0xff]
  %v90 = vld [vmem:[%s2 + $0x1f0] sm:$0xff]
  %v91 = vld [vmem:[%s2 + $0x1f8] sm:$0xff]
  %v92 = vld [vmem:[%s2 + $0x200] sm:$0xff]
  %v93 = vld [vmem:[%s2 + $0x208] sm:$0xff]
  %v94 = vld [vmem:[%s2 + $0x210] sm:$0xff]
  %v95 = vld [vmem:[%s2 + $0x218] sm:$0xff]
  %v96 = vld [vmem:[%s2 + $0x220] sm:$0xff]
  %v97 = vld [vmem:[%s2 + $0x228] sm:$0xff]
  %v98 = vld [vmem:[%s2 + $0x230] sm:$0xff]
  %v99 = vld [vmem:[%s2 + $0x238] sm:$0xff]
  %v100 = vld [vmem:[%s2 + $0x240] sm:$0xff]
  %v101 = vld [vmem:[%s2 + $0x248] sm:$0xff]
  %v102 = vld [vmem:[%s2 + $0x250] sm:$0xff]
  %v103 = vld [vmem:[%s2 + $0x258] sm:$0xff]
  %v104 = vld [vmem:[%s2 + $0x260] sm:$0xff]
  %v105 = vld [vmem:[%s2 + $0x268] sm:$0xff]
  %v106 = vld [vmem:[%s2 + $0x270] sm:$0xff]
  %v107 = vld [vmem:[%s2 + $0x278] sm:$0xff]
  %v108 = vld [vmem:[%s2 + $0x280] sm:$0xff]
  %v109 = vld [vmem:[%s2 + $0x288] sm:$0xff]
  %v110 = vld [vmem:[%s2 + $0x290] sm:$0xff]
  %v111 = vld [vmem:[%s2 + $0x298] sm:$0xff]
  %v112 = vld [vmem:[%s2 + $0x2a0] sm:$0xff]
  %v113 = vld [vmem:[%s2 + $0x2a8] sm:$0xff]
  %v114 = vld [vmem:[%s2 + $0x2b0] sm:$0xff]
  %v115 = vld [vmem:[%s2 + $0x2b8] sm:$0xff]
  %v116 = vld [vmem:[%s2 + $0x2c0] sm:$0xff]
  %v117 = vld [vmem:[%s2 + $0x2c8] sm:$0xff]
  %v118 = vld [vmem:[%s2 + $0x2d0] sm:$0xff]
  %v119 = vld [vmem:[%s2 + $0x2d8] sm:$0xff]
  %v120 = vld [vmem:[%s2 + $0x2e0] sm:$0xff]
  %v121 = vld [vmem:[%s2 + $0x2e8] sm:$0xff]
  %v122 = vld [vmem:[%s2 + $0x2f0] sm:$0xff]
  %v123 = vld [vmem:[%s2 + $0x2f8] sm:$0xff]
  %v124 = vld [vmem:[%s2 + $0x300] sm:$0xff]
  %v125 = vld [vmem:[%s2 + $0x308] sm:$0xff]
  %v126 = vld [vmem:[%s2 + $0x310] sm:$0xff]
  %v127 = vld [vmem:[%s2 + $0x318] sm:$0xff]
  %v128 = vld [vmem:[%s2 + $0x320] sm:$0xff]
  %v129 = vld [vmem:[%s2 + $0x328] sm:$0xff]
  %v130 = vld [vmem:[%s2 + $0x330] sm:$0xff]
  %v131 = vld [vmem:[%s2 + $0x338] sm:$0xff]
  %v132 = vld [vmem:[%s2 + $0x340] sm:$0xff]
  %v133 = vld [vmem:[%s2 + $0x348] sm:$0xff]
  %v134 = vld [vmem:[%s2 + $0x350] sm:$0xff]
  %v135 = vld [vmem:[%s2 + $0x358] sm:$0xff]
  %v136 = vld [vmem:[%s2 + $0x360] sm:$0xff]
  %v137 = vld [vmem:[%s2 + $0x368] sm:$0xff]
  %v138 = vld [vmem:[%s2 + $0x370] sm:$0xff]
  %v139 = vld [vmem:[%s2 + $0x378] sm:$0xff]
  %v140 = vld [vmem:[%s2 + $0x380] sm:$0xff]
  %v141 = vld [vmem:[%s2 + $0x388] sm:$0xff]
  %v142 = vld [vmem:[%s2 + $0x390] sm:$0xff]
  %v143 = vld [vmem:[%s2 + $0x398] sm:$0xff]
  %v144 = vld [vmem:[%s2 + $0x3a0] sm:$0xff]
  %v145 = vld [vmem:[%s2 + $0x3a8] sm:$0xff]
  %v146 = vld [vmem:[%s2 + $0x3b0] sm:$0xff]
  %v147 = vld [vmem:[%s2 + $0x3b8] sm:$0xff]
  %v148 = vld [vmem:[%s2 + $0x3c0] sm:$0xff]
  %v149 = vld [vmem:[%s2 + $0x3c8] sm:$0xff]
  %v150 = vld [vmem:[%s2 + $0x3d0] sm:$0xff]
  %v151 = vld [vmem:[%s2 + $0x3d8] sm:$0xff]
  %v152 = vld [vmem:[%s2 + $0x3e0] sm:$0xff]
  %v153 = vld [vmem:[%s2 + $0x3e8] sm:$0xff]
  %v154 = vld [vmem:[%s2 + $0x3f0] sm:$0xff]
  %v155 = vld [vmem:[%s2 + $0x3f8] sm:$0xff]
  %v156 = vld [vmem:[%s2 + $0x400] sm:$0xff]
  %v157 = vld [vmem:[%s2 + $0x408] sm:$0xff]
  %v158 = vld [vmem:[%s2 + $0x410] sm:$0xff]
  %v159 = vld [vmem:[%s2 + $0x418] sm:$0xff]
  %v160 = vld [vmem:[%s2 + $0x420] sm:$0xff]
  %v161 = vld [vmem:[%s2 + $0x428] sm:$0xff]
  %v162 = vld [vmem:[%s2 + $0x430] sm:$0xff]
  %v163 = vld [vmem:[%s2 + $0x438] sm:$0xff]
  %v164 = vld [vmem:[%s2 + $0x440] sm:$0xff]
  %v165 = vld [vmem:[%s2 + $0x448] sm:$0xff]
  %v166 = vld [vmem:[%s2 + $0x450] sm:$0xff]
  %v167 = vld [vmem:[%s2 + $0x458] sm:$0xff]
  %v168 = vld [vmem:[%s2 + $0x460] sm:$0xff]
  %v169 = vld [vmem:[%s2 + $0x468] sm:$0xff]
  %v170 = vld [vmem:[%s2 + $0x470] sm:$0xff]
  %v171 = vld [vmem:[%s2 + $0x478] sm:$0xff]
  %v172 = vld [vmem:[%s2 + $0x480] sm:$0xff]
  %v173 = vld [vmem:[%s2 + $0x488] sm:$0xff]
  %v174 = vld [vmem:[%s2 + $0x490] sm:$0xff]
  %v175 = vld [vmem:[%s2 + $0x498] sm:$0xff]
  %v176 = vld [vmem:[%s2 + $0x4a0] sm:$0xff]
  %v177 = vld [vmem:[%s2 + $0x4a8] sm:$0xff]
  %v178 = vld [vmem:[%s2 + $0x4b0] sm:$0xff]
  %v179 = vld [vmem:[%s2 + $0x4b8] sm:$0xff]
  %v180 = vld [vmem:[%s2 + $0x4c0] sm:$0xff]
  %v181 = vld [vmem:[%s2 + $0x4c8] sm:$0xff]
  %v182 = vld [vmem:[%s2 + $0x4d0] sm:$0xff]
  %v183 = vld [vmem:[%s2 + $0x4d8] sm:$0xff]
  %v184 = vld [vmem:[%s2 + $0x4e0] sm:$0xff]
  %v185 = vld [vmem:[%s2 + $0x4e8] sm:$0xff]
  %v186 = vld [vmem:[%s2 + $0x4f0] sm:$0xff]
  %v187 = vld [vmem:[%s2 + $0x4f8] sm:$0xff]
  %v188 = vld [vmem:[%s2 + $0x500] sm:$0xff]
  %v189 = vld [vmem:[%s2 + $0x508] sm:$0xff]
  %v190 = vld [vmem:[%s2 + $0x510] sm:$0xff]
  %v191 = vld [vmem:[%s2 + $0x518] sm:$0xff]
  %v192 = vld [vmem:[%s2 + $0x520] sm:$0xff]
  %v193 = vld [vmem:[%s2 + $0x528] sm:$0xff]
  %v194 = vld [vmem:[%s2 + $0x530] sm:$0xff]
  %v195 = vld [vmem:[%s2 + $0x538] sm:$0xff]
  %v196 = vld [vmem:[%s2 + $0x540] sm:$0xff]
  %v197 = vld [vmem:[%s2 + $0x548] sm:$0xff]
  %v198 = vld [vmem:[%s2 + $0x550] sm:$0xff]
  %v199 = vld [vmem:[%s2 + $0x558] sm:$0xff]
  %v200 = vld [vmem:[%s2 + $0x560] sm:$0xff]
  %v201 = vld [vmem:[%s2 + $0x568] sm:$0xff]
  %v202 = vld [vmem:[%s2 + $0x570] sm:$0xff]
  %v203 = vld [vmem:[%s2 + $0x578] sm:$0xff]
  %v204 = vld [vmem:[%s2 + $0x580] sm:$0xff]
  %v205 = vld [vmem:[%s2 + $0x588] sm:$0xff]
  %v206 = vld [vmem:[%s2 + $0x590] sm:$0xff]
  %v207 = vld [vmem:[%s2 + $0x598] sm:$0xff]
  %v208 = vld [vmem:[%s2 + $0x5a0] sm:$0xff]
  %v209 = vld [vmem:[%s2 + $0x5a8] sm:$0xff]
  %v210 = vld [vmem:[%s2 + $0x5b0] sm:$0xff]
  %v211 = vld [vmem:[%s2 + $0x5b8] sm:$0xff]
  %v212 = vld [vmem:[%s2 + $0x5c0] sm:$0xff]
  %v213 = vld [vmem:[%s2 + $0x5c8] sm:$0xff]
  %v214 = vld [vmem:[%s2 + $0x5d0] sm:$0xff]
  %v215 = vld [vmem:[%s2 + $0x5d8] sm:$0xff]
  %v216 = vld [vmem:[%s2 + $0x5e0] sm:$0xff]
  %v217 = vld [vmem:[%s2 + $0x5e8] sm:$0xff]
  %v218 = vld [vmem:[%s2 + $0x5f0] sm:$0xff]
  %v219 = vld [vmem:[%s2 + $0x5f8] sm:$0xff]
  %v220 = vld [vmem:[%s2 + $0x600] sm:$0xff]
  %v221 = vld [vmem:[%s2 + $0x608] sm:$0xff]
  %v222 = vld [vmem:[%s2 + $0x610] sm:$0xff]
  %v223 = vld [vmem:[%s2 + $0x618] sm:$0xff]
  %v224 = vld [vmem:[%s2 + $0x620] sm:$0xff]
  %v225 = vld [vmem:[%s2 + $0x628] sm:$0xff]
  %v226 = vld [vmem:[%s2 + $0x630] sm:$0xff]
  %v227 = vld [vmem:[%s2 + $0x638] sm:$0xff]
  %v228 = vld [vmem:[%s2 + $0x640] sm:$0xff]
  %v229 = vld [vmem:[%s2 + $0x648] sm:$0xff]
  %v230 = vld [vmem:[%s2 + $0x650] sm:$0xff]
  %v231 = vld [vmem:[%s2 + $0x658] sm:$0xff]
  %v232 = vld [vmem:[%s2 + $0x660] sm:$0xff]
  %v233 = vld [vmem:[%s2 + $0x668] sm:$0xff]
  %v234 = vld [vmem:[%s2 + $0x670] sm:$0xff]
  %v235 = vld [vmem:[%s2 + $0x678] sm:$0xff]
  %v236 = vld [vmem:[%s2 + $0x680] sm:$0xff]
  %v237 = vld [vmem:[%s2 + $0x688] sm:$0xff]
  %v238 = vld [vmem:[%s2 + $0x690] sm:$0xff]
  %v239 = vld [vmem:[%s2 + $0x698] sm:$0xff]
  %v240 = vld [vmem:[%s2 + $0x6a0] sm:$0xff]
  %v241 = vld [vmem:[%s2 + $0x6a8] sm:$0xff]
  %v242 = vld [vmem:[%s2 + $0x6b0] sm:$0xff]
  %v243 = vld [vmem:[%s2 + $0x6b8] sm:$0xff]
  %v246 = vlaneseq
  %v247 = vshrl.u32 %v246, 7
  %v248 = vsub.s32 0, %v247
  %v249 = vrot.slane %v25, %v248
  %v250 = vlaneseq
  %v251 = vshrl.u32 %v250, 7
  %v252 = vsub.s32 1, %v251
  %v253 = vrot.slane %v25, %v252
  %v254 = vlaneseq
  %v255 = vshrl.u32 %v254, 7
  %v256 = vsub.s32 2, %v255
  %v257 = vrot.slane %v25, %v256
  %v258 = vlaneseq
  %v259 = vshrl.u32 %v258, 7
  %v260 = vsub.s32 3, %v259
  %v261 = vrot.slane %v25, %v260
  %v262 = vlaneseq
  %v263 = vshrl.u32 %v262, 7
  %v264 = vsub.s32 4, %v263
  %v265 = vrot.slane %v25, %v264
  %v266 = vlaneseq
  %v267 = vshrl.u32 %v266, 7
  %v268 = vsub.s32 5, %v267
  %v269 = vrot.slane %v25, %v268
  %v270 = vlaneseq
  %v271 = vshrl.u32 %v270, 7
  %v272 = vsub.s32 6, %v271
  %v273 = vrot.slane %v25, %v272
  %v274 = vlaneseq
  %v275 = vshrl.u32 %v274, 7
  %v276 = vsub.s32 7, %v275
  %v277 = vrot.slane %v25, %v276
  %v278 = vlaneseq
  %v279 = vshrl.u32 %v278, 7
  %v280 = vsub.s32 0, %v279
  %v281 = vrot.slane %v27, %v280
  %v291 = vmul.f32 %v28, %v249
  %v292 = vmul.f32 %v29, %v253
  %v293 = vmul.f32 %v30, %v257
  %v294 = vmul.f32 %v31, %v261
  %v295 = vmul.f32 %v32, %v265
  %v296 = vmul.f32 %v33, %v269
  %v297 = vmul.f32 %v34, %v273
  %v298 = vmul.f32 %v35, %v277
  %v299 = vmul.f32 %v36, %v281
  %v300 = vmul.f32 %v37, %v249
  %v301 = vmul.f32 %v38, %v253
  %v302 = vmul.f32 %v39, %v257
  %v303 = vmul.f32 %v40, %v261
  %v304 = vmul.f32 %v41, %v265
  %v305 = vmul.f32 %v42, %v269
  %v306 = vmul.f32 %v43, %v273
  %v307 = vmul.f32 %v44, %v277
  %v308 = vmul.f32 %v45, %v281
  %v309 = vmul.f32 %v46, %v249
  %v310 = vmul.f32 %v47, %v253
  %v311 = vmul.f32 %v48, %v257
  %v312 = vmul.f32 %v49, %v261
  %v313 = vmul.f32 %v50, %v265
  %v314 = vmul.f32 %v51, %v269
  %v315 = vmul.f32 %v52, %v273
  %v316 = vmul.f32 %v53, %v277
  %v317 = vmul.f32 %v54, %v281
  %v318 = vmul.f32 %v55, %v249
  %v319 = vmul.f32 %v56, %v253
  %v320 = vmul.f32 %v57, %v257
  %v321 = vmul.f32 %v58, %v261
  %v322 = vmul.f32 %v59, %v265
  %v323 = vmul.f32 %v60, %v269
  %v324 = vmul.f32 %v61, %v273
  %v325 = vmul.f32 %v62, %v277
  %v326 = vmul.f32 %v63, %v281
  %v327 = vmul.f32 %v64, %v249
  %v328 = vmul.f32 %v65, %v253
  %v329 = vmul.f32 %v66, %v257
  %v330 = vmul.f32 %v67, %v261
  %v331 = vmul.f32 %v68, %v265
  %v332 = vmul.f32 %v69, %v269
  %v333 = vmul.f32 %v70, %v273
  %v334 = vmul.f32 %v71, %v277
  %v335 = vmul.f32 %v72, %v281
  %v336 = vmul.f32 %v73, %v249
  %v337 = vmul.f32 %v74, %v253
  %v338 = vmul.f32 %v75, %v257
  %v339 = vmul.f32 %v76, %v261
  %v340 = vmul.f32 %v77, %v265
  %v341 = vmul.f32 %v78, %v269
  %v342 = vmul.f32 %v79, %v273
  %v343 = vmul.f32 %v80, %v277
  %v344 = vmul.f32 %v81, %v281
  %v345 = vmul.f32 %v82, %v249
  %v346 = vmul.f32 %v83, %v253
  %v347 = vmul.f32 %v84, %v257
  %v348 = vmul.f32 %v85, %v261
  %v349 = vmul.f32 %v86, %v265
  %v350 = vmul.f32 %v87, %v269
  %v351 = vmul.f32 %v88, %v273
  %v352 = vmul.f32 %v89, %v277
  %v353 = vmul.f32 %v90, %v281
  %v354 = vmul.f32 %v91, %v249
  %v355 = vmul.f32 %v92, %v253
  %v356 = vmul.f32 %v93, %v257
  %v357 = vmul.f32 %v94, %v261
  %v358 = vmul.f32 %v95, %v265
  %v359 = vmul.f32 %v96, %v269
  %v360 = vmul.f32 %v97, %v273
  %v361 = vmul.f32 %v98, %v277
  %v362 = vmul.f32 %v99, %v281
  %v363 = vmul.f32 %v100, %v249
  %v364 = vmul.f32 %v101, %v253
  %v365 = vmul.f32 %v102, %v257
  %v366 = vmul.f32 %v103, %v261
  %v367 = vmul.f32 %v104, %v265
  %v368 = vmul.f32 %v105, %v269
  %v369 = vmul.f32 %v106, %v273
  %v370 = vmul.f32 %v107, %v277
  %v371 = vmul.f32 %v108, %v281
  %v372 = vmul.f32 %v109, %v249
  %v373 = vmul.f32 %v110, %v253
  %v374 = vmul.f32 %v111, %v257
  %v375 = vmul.f32 %v112, %v261
  %v376 = vmul.f32 %v113, %v265
  %v377 = vmul.f32 %v114, %v269
  %v378 = vmul.f32 %v115, %v273
  %v379 = vmul.f32 %v116, %v277
  %v380 = vmul.f32 %v117, %v281
  %v381 = vmul.f32 %v118, %v249
  %v382 = vmul.f32 %v119, %v253
  %v383 = vmul.f32 %v120, %v257
  %v384 = vmul.f32 %v121, %v261
  %v385 = vmul.f32 %v122, %v265
  %v386 = vmul.f32 %v123, %v269
  %v387 = vmul.f32 %v124, %v273
  %v388 = vmul.f32 %v125, %v277
  %v389 = vmul.f32 %v126, %v281
  %v390 = vmul.f32 %v127, %v249
  %v391 = vmul.f32 %v128, %v253
  %v392 = vmul.f32 %v129, %v257
  %v393 = vmul.f32 %v130, %v261
  %v394 = vmul.f32 %v131, %v265
  %v395 = vmul.f32 %v132, %v269
  %v396 = vmul.f32 %v133, %v273
  %v397 = vmul.f32 %v134, %v277
  %v398 = vmul.f32 %v135, %v281
  %v399 = vmul.f32 %v136, %v249
  %v400 = vmul.f32 %v137, %v253
  %v401 = vmul.f32 %v138, %v257
  %v402 = vmul.f32 %v139, %v261
  %v403 = vmul.f32 %v140, %v265
  %v404 = vmul.f32 %v141, %v269
  %v405 = vmul.f32 %v142, %v273
  %v406 = vmul.f32 %v143, %v277
  %v407 = vmul.f32 %v144, %v281
  %v408 = vmul.f32 %v145, %v249
  %v409 = vmul.f32 %v146, %v253
  %v410 = vmul.f32 %v147, %v257
  %v411 = vmul.f32 %v148, %v261
  %v412 = vmul.f32 %v149, %v265
  %v413 = vmul.f32 %v150, %v269
  %v414 = vmul.f32 %v151, %v273
  %v415 = vmul.f32 %v152, %v277
  %v416 = vmul.f32 %v153, %v281
  %v417 = vmul.f32 %v154, %v249
  %v418 = vmul.f32 %v155, %v253
  %v419 = vmul.f32 %v156, %v257
  %v420 = vmul.f32 %v157, %v261
  %v421 = vmul.f32 %v158, %v265
  %v422 = vmul.f32 %v159, %v269
  %v423 = vmul.f32 %v160, %v273
  %v424 = vmul.f32 %v161, %v277
  %v425 = vmul.f32 %v162, %v281
  %v426 = vmul.f32 %v163, %v249
  %v427 = vmul.f32 %v164, %v253
  %v428 = vmul.f32 %v165, %v257
  %v429 = vmul.f32 %v166, %v261
  %v430 = vmul.f32 %v167, %v265
  %v431 = vmul.f32 %v168, %v269
  %v432 = vmul.f32 %v169, %v273
  %v433 = vmul.f32 %v170, %v277
  %v434 = vmul.f32 %v171, %v281
  %v435 = vmul.f32 %v172, %v249
  %v436 = vmul.f32 %v173, %v253
  %v437 = vmul.f32 %v174, %v257
  %v438 = vmul.f32 %v175, %v261
  %v439 = vmul.f32 %v176, %v265
  %v440 = vmul.f32 %v177, %v269
  %v441 = vmul.f32 %v178, %v273
  %v442 = vmul.f32 %v179, %v277
  %v443 = vmul.f32 %v180, %v281
  %v444 = vmul.f32 %v181, %v249
  %v445 = vmul.f32 %v182, %v253
  %v446 = vmul.f32 %v183, %v257
  %v447 = vmul.f32 %v184, %v261
  %v448 = vmul.f32 %v185, %v265
  %v449 = vmul.f32 %v186, %v269
  %v450 = vmul.f32 %v187, %v273
  %v451 = vmul.f32 %v188, %v277
  %v452 = vmul.f32 %v189, %v281
  %v453 = vmul.f32 %v190, %v249
  %v454 = vmul.f32 %v191, %v253
  %v455 = vmul.f32 %v192, %v257
  %v456 = vmul.f32 %v193, %v261
  %v457 = vmul.f32 %v194, %v265
  %v458 = vmul.f32 %v195, %v269
  %v459 = vmul.f32 %v196, %v273
  %v460 = vmul.f32 %v197, %v277
  %v461 = vmul.f32 %v198, %v281
  %v462 = vmul.f32 %v199, %v249
  %v463 = vmul.f32 %v200, %v253
  %v464 = vmul.f32 %v201, %v257
  %v465 = vmul.f32 %v202, %v261
  %v466 = vmul.f32 %v203, %v265
  %v467 = vmul.f32 %v204, %v269
  %v468 = vmul.f32 %v205, %v273
  %v469 = vmul.f32 %v206, %v277
  %v470 = vmul.f32 %v207, %v281
  %v471 = vmul.f32 %v208, %v249
  %v472 = vmul.f32 %v209, %v253
  %v473 = vmul.f32 %v210, %v257
  %v474 = vmul.f32 %v211, %v261
  %v475 = vmul.f32 %v212, %v265
  %v476 = vmul.f32 %v213, %v269
  %v477 = vmul.f32 %v214, %v273
  %v478 = vmul.f32 %v215, %v277
  %v479 = vmul.f32 %v216, %v281
  %v480 = vmul.f32 %v217, %v249
  %v481 = vmul.f32 %v218, %v253
  %v482 = vmul.f32 %v219, %v257
  %v483 = vmul.f32 %v220, %v261
  %v484 = vmul.f32 %v221, %v265
  %v485 = vmul.f32 %v222, %v269
  %v486 = vmul.f32 %v223, %v273
  %v487 = vmul.f32 %v224, %v277
  %v488 = vmul.f32 %v225, %v281
  %v489 = vmul.f32 %v226, %v249
  %v490 = vmul.f32 %v227, %v253
  %v491 = vmul.f32 %v228, %v257
  %v492 = vmul.f32 %v229, %v261
  %v493 = vmul.f32 %v230, %v265
  %v494 = vmul.f32 %v231, %v269
  %v495 = vmul.f32 %v232, %v273
  %v496 = vmul.f32 %v233, %v277
  %v497 = vmul.f32 %v234, %v281
  %v498 = vmul.f32 %v235, %v249
  %v499 = vmul.f32 %v236, %v253
  %v500 = vmul.f32 %v237, %v257
  %v501 = vmul.f32 %v238, %v261
  %v502 = vmul.f32 %v239, %v265
  %v503 = vmul.f32 %v240, %v269
  %v504 = vmul.f32 %v241, %v273
  %v505 = vmul.f32 %v242, %v277
  %v506 = vmul.f32 %v243, %v281
  %v507 = vld [vmem:[%s1] sm:$0xff]
  %v508 = vld [vmem:[%s1 + $0x8] sm:$0xff]
  %v509 = vld [vmem:[%s1 + $0x10] sm:$0xff]
  %v510 = vld [vmem:[%s1 + $0x18] sm:$0xff]
  %v511 = vld [vmem:[%s1 + $0x20] sm:$0xff]
  %v512 = vld [vmem:[%s1 + $0x28] sm:$0xff]
  %v513 = vld [vmem:[%s1 + $0x30] sm:$0xff]
  %v514 = vld [vmem:[%s1 + $0x38] sm:$0xff]
  %v515 = vld [vmem:[%s1 + $0x40] sm:$0xff]
  %v516 = vld [vmem:[%s1 + $0x48] sm:$0xff]
  %v517 = vld [vmem:[%s1 + $0x50] sm:$0xff]
  %v518 = vld [vmem:[%s1 + $0x58] sm:$0xff]
  %v519 = vld [vmem:[%s1 + $0x60] sm:$0xff]
  %v520 = vld [vmem:[%s1 + $0x68] sm:$0xff]
  %v521 = vld [vmem:[%s1 + $0x70] sm:$0xff]
  %v522 = vld [vmem:[%s1 + $0x78] sm:$0xff]
  %v523 = vld [vmem:[%s1 + $0x80] sm:$0xff]
  %v524 = vld [vmem:[%s1 + $0x88] sm:$0xff]
  %v525 = vld [vmem:[%s1 + $0x90] sm:$0xff]
  %v526 = vld [vmem:[%s1 + $0x98] sm:$0xff]
  %v527 = vld [vmem:[%s1 + $0xa0] sm:$0xff]
  %v528 = vld [vmem:[%s1 + $0xa8] sm:$0xff]
  %v529 = vld [vmem:[%s1 + $0xb0] sm:$0xff]
  %v530 = vld [vmem:[%s1 + $0xb8] sm:$0xff]
  %v531 = vld [vmem:[%s1 + $0xc0] sm:$0xff]
  %v532 = vld [vmem:[%s1 + $0xc8] sm:$0xff]
  %v533 = vld [vmem:[%s1 + $0xd0] sm:$0xff]
  %v534 = vld [vmem:[%s1 + $0xd8] sm:$0xff]
  %v535 = vld [vmem:[%s1 + $0xe0] sm:$0xff]
  %v536 = vld [vmem:[%s1 + $0xe8] sm:$0xff]
  %v537 = vld [vmem:[%s1 + $0xf0] sm:$0xff]
  %v538 = vld [vmem:[%s1 + $0xf8] sm:$0xff]
  %v539 = vld [vmem:[%s1 + $0x100] sm:$0xff]
  %v540 = vld [vmem:[%s1 + $0x108] sm:$0xff]
  %v541 = vld [vmem:[%s1 + $0x110] sm:$0xff]
  %v542 = vld [vmem:[%s1 + $0x118] sm:$0xff]
  %v543 = vld [vmem:[%s1 + $0x120] sm:$0xff]
  %v544 = vld [vmem:[%s1 + $0x128] sm:$0xff]
  %v545 = vld [vmem:[%s1 + $0x130] sm:$0xff]
  %v546 = vld [vmem:[%s1 + $0x138] sm:$0xff]
  %v547 = vld [vmem:[%s1 + $0x140] sm:$0xff]
  %v548 = vld [vmem:[%s1 + $0x148] sm:$0xff]
  %v549 = vld [vmem:[%s1 + $0x150] sm:$0xff]
  %v550 = vld [vmem:[%s1 + $0x158] sm:$0xff]
  %v551 = vld [vmem:[%s1 + $0x160] sm:$0xff]
  %v552 = vld [vmem:[%s1 + $0x168] sm:$0xff]
  %v553 = vld [vmem:[%s1 + $0x170] sm:$0xff]
  %v554 = vld [vmem:[%s1 + $0x178] sm:$0xff]
  %v555 = vld [vmem:[%s1 + $0x180] sm:$0xff]
  %v556 = vld [vmem:[%s1 + $0x188] sm:$0xff]
  %v557 = vld [vmem:[%s1 + $0x190] sm:$0xff]
  %v558 = vld [vmem:[%s1 + $0x198] sm:$0xff]
  %v559 = vld [vmem:[%s1 + $0x1a0] sm:$0xff]
  %v560 = vld [vmem:[%s1 + $0x1a8] sm:$0xff]
  %v561 = vld [vmem:[%s1 + $0x1b0] sm:$0xff]
  %v562 = vld [vmem:[%s1 + $0x1b8] sm:$0xff]
  %v563 = vld [vmem:[%s1 + $0x1c0] sm:$0xff]
  %v564 = vld [vmem:[%s1 + $0x1c8] sm:$0xff]
  %v565 = vld [vmem:[%s1 + $0x1d0] sm:$0xff]
  %v566 = vld [vmem:[%s1 + $0x1d8] sm:$0xff]
  %v567 = vld [vmem:[%s1 + $0x1e0] sm:$0xff]
  %v568 = vld [vmem:[%s1 + $0x1e8] sm:$0xff]
  %v569 = vld [vmem:[%s1 + $0x1f0] sm:$0xff]
  %v570 = vld [vmem:[%s1 + $0x1f8] sm:$0xff]
  %v571 = vld [vmem:[%s1 + $0x200] sm:$0xff]
  %v572 = vld [vmem:[%s1 + $0x208] sm:$0xff]
  %v573 = vld [vmem:[%s1 + $0x210] sm:$0xff]
  %v574 = vld [vmem:[%s1 + $0x218] sm:$0xff]
  %v575 = vld [vmem:[%s1 + $0x220] sm:$0xff]
  %v576 = vld [vmem:[%s1 + $0x228] sm:$0xff]
  %v577 = vld [vmem:[%s1 + $0x230] sm:$0xff]
  %v578 = vld [vmem:[%s1 + $0x238] sm:$0xff]
  %v579 = vld [vmem:[%s1 + $0x240] sm:$0xff]
  %v580 = vld [vmem:[%s1 + $0x248] sm:$0xff]
  %v581 = vld [vmem:[%s1 + $0x250] sm:$0xff]
  %v582 = vld [vmem:[%s1 + $0x258] sm:$0xff]
  %v583 = vld [vmem:[%s1 + $0x260] sm:$0xff]
  %v584 = vld [vmem:[%s1 + $0x268] sm:$0xff]
  %v585 = vld [vmem:[%s1 + $0x270] sm:$0xff]
  %v586 = vld [vmem:[%s1 + $0x278] sm:$0xff]
  %v587 = vld [vmem:[%s1 + $0x280] sm:$0xff]
  %v588 = vld [vmem:[%s1 + $0x288] sm:$0xff]
  %v589 = vld [vmem:[%s1 + $0x290] sm:$0xff]
  %v590 = vld [vmem:[%s1 + $0x298] sm:$0xff]
  %v591 = vld [vmem:[%s1 + $0x2a0] sm:$0xff]
  %v592 = vld [vmem:[%s1 + $0x2a8] sm:$0xff]
  %v593 = vld [vmem:[%s1 + $0x2b0] sm:$0xff]
  %v594 = vld [vmem:[%s1 + $0x2b8] sm:$0xff]
  %v595 = vld [vmem:[%s1 + $0x2c0] sm:$0xff]
  %v596 = vld [vmem:[%s1 + $0x2c8] sm:$0xff]
  %v597 = vld [vmem:[%s1 + $0x2d0] sm:$0xff]
  %v598 = vld [vmem:[%s1 + $0x2d8] sm:$0xff]
  %v599 = vld [vmem:[%s1 + $0x2e0] sm:$0xff]
  %v600 = vld [vmem:[%s1 + $0x2e8] sm:$0xff]
  %v601 = vld [vmem:[%s1 + $0x2f0] sm:$0xff]
  %v602 = vld [vmem:[%s1 + $0x2f8] sm:$0xff]
  %v603 = vld [vmem:[%s1 + $0x300] sm:$0xff]
  %v604 = vld [vmem:[%s1 + $0x308] sm:$0xff]
  %v605 = vld [vmem:[%s1 + $0x310] sm:$0xff]
  %v606 = vld [vmem:[%s1 + $0x318] sm:$0xff]
  %v607 = vld [vmem:[%s1 + $0x320] sm:$0xff]
  %v608 = vld [vmem:[%s1 + $0x328] sm:$0xff]
  %v609 = vld [vmem:[%s1 + $0x330] sm:$0xff]
  %v610 = vld [vmem:[%s1 + $0x338] sm:$0xff]
  %v611 = vld [vmem:[%s1 + $0x340] sm:$0xff]
  %v612 = vld [vmem:[%s1 + $0x348] sm:$0xff]
  %v613 = vld [vmem:[%s1 + $0x350] sm:$0xff]
  %v614 = vld [vmem:[%s1 + $0x358] sm:$0xff]
  %v615 = vld [vmem:[%s1 + $0x360] sm:$0xff]
  %v616 = vld [vmem:[%s1 + $0x368] sm:$0xff]
  %v617 = vld [vmem:[%s1 + $0x370] sm:$0xff]
  %v618 = vld [vmem:[%s1 + $0x378] sm:$0xff]
  %v619 = vld [vmem:[%s1 + $0x380] sm:$0xff]
  %v620 = vld [vmem:[%s1 + $0x388] sm:$0xff]
  %v621 = vld [vmem:[%s1 + $0x390] sm:$0xff]
  %v622 = vld [vmem:[%s1 + $0x398] sm:$0xff]
  %v623 = vld [vmem:[%s1 + $0x3a0] sm:$0xff]
  %v624 = vld [vmem:[%s1 + $0x3a8] sm:$0xff]
  %v625 = vld [vmem:[%s1 + $0x3b0] sm:$0xff]
  %v626 = vld [vmem:[%s1 + $0x3b8] sm:$0xff]
  %v627 = vld [vmem:[%s1 + $0x3c0] sm:$0xff]
  %v628 = vld [vmem:[%s1 + $0x3c8] sm:$0xff]
  %v629 = vld [vmem:[%s1 + $0x3d0] sm:$0xff]
  %v630 = vld [vmem:[%s1 + $0x3d8] sm:$0xff]
  %v631 = vld [vmem:[%s1 + $0x3e0] sm:$0xff]
  %v632 = vld [vmem:[%s1 + $0x3e8] sm:$0xff]
  %v633 = vld [vmem:[%s1 + $0x3f0] sm:$0xff]
  %v634 = vld [vmem:[%s1 + $0x3f8] sm:$0xff]
  %v635 = vld [vmem:[%s1 + $0x400] sm:$0xff]
  %v636 = vld [vmem:[%s1 + $0x408] sm:$0xff]
  %v637 = vld [vmem:[%s1 + $0x410] sm:$0xff]
  %v638 = vld [vmem:[%s1 + $0x418] sm:$0xff]
  %v639 = vld [vmem:[%s1 + $0x420] sm:$0xff]
  %v640 = vld [vmem:[%s1 + $0x428] sm:$0xff]
  %v641 = vld [vmem:[%s1 + $0x430] sm:$0xff]
  %v642 = vld [vmem:[%s1 + $0x438] sm:$0xff]
  %v643 = vld [vmem:[%s1 + $0x440] sm:$0xff]
  %v644 = vld [vmem:[%s1 + $0x448] sm:$0xff]
  %v645 = vld [vmem:[%s1 + $0x450] sm:$0xff]
  %v646 = vld [vmem:[%s1 + $0x458] sm:$0xff]
  %v647 = vld [vmem:[%s1 + $0x460] sm:$0xff]
  %v648 = vld [vmem:[%s1 + $0x468] sm:$0xff]
  %v649 = vld [vmem:[%s1 + $0x470] sm:$0xff]
  %v650 = vld [vmem:[%s1 + $0x478] sm:$0xff]
  %651 = vmatprep.subr.mxu0 0.0
  %652 = vmatpush1.msra.mxu0 %v507
  %653 = vmatprep.subr.mxu0 0.0
  %654 = vmatpush1.msra.mxu0 %v508
  %655 = vmatprep.subr.mxu0 0.0
  %656 = vmatpush1.msra.mxu0 %v509
  %657 = vmatprep.subr.mxu0 0.0
  %658 = vmatpush1.msra.mxu0 %v510
  %659 = vmatprep.subr.mxu0 0.0
  %660 = vmatpush1.msra.mxu0 %v511
  %661 = vmatprep.subr.mxu0 0.0
  %662 = vmatpush1.msra.mxu0 %v512
  %663 = vmatprep.subr.mxu0 0.0
  %664 = vmatpush1.msra.mxu0 %v513
  %665 = vmatprep.subr.mxu0 0.0
  %666 = vmatpush1.msra.mxu0 %v514
  %667 = vmatprep.subr.mxu0 0.0
  %668 = vmatpush1.msra.mxu0 %v515
  %669 = vmatprep.subr.mxu0 0.0
  %670 = vmatpush1.msra.mxu0 %v516
  %671 = vmatprep.subr.mxu0 0.0
  %672 = vmatpush1.msra.mxu0 %v517
  %673 = vmatprep.subr.mxu0 0.0
  %674 = vmatpush1.msra.mxu0 %v518
  %675 = vmatprep.subr.mxu0 0.0
  %676 = vmatpush1.msra.mxu0 %v519
  %677 = vmatprep.subr.mxu0 0.0
  %678 = vmatpush1.msra.mxu0 %v520
  %679 = vmatprep.subr.mxu0 0.0
  %680 = vmatpush1.msra.mxu0 %v521
  %681 = vmatprep.subr.mxu0 0.0
  %682 = vmatpush1.msra.mxu0 %v522
  %683 = vmatprep.subr.mxu0 0.0
  %684 = vmatpush1.msra.mxu0 %v523
  %685 = vmatprep.subr.mxu0 0.0
  %686 = vmatpush1.msra.mxu0 %v524
  %687 = vmatprep.subr.mxu0 0.0
  %688 = vmatpush1.msra.mxu0 %v525
  %689 = vmatprep.subr.mxu0 0.0
  %690 = vmatpush1.msra.mxu0 %v526
  %691 = vmatprep.subr.mxu0 0.0
  %692 = vmatpush1.msra.mxu0 %v527
  %693 = vmatprep.subr.mxu0 0.0
  %694 = vmatpush1.msra.mxu0 %v528
  %695 = vmatprep.subr.mxu0 0.0
  %696 = vmatpush1.msra.mxu0 %v529
  %697 = vmatprep.subr.mxu0 0.0
  %698 = vmatpush1.msra.mxu0 %v530
  %699 = vmatprep.subr.mxu0 0.0
  %700 = vmatpush1.msra.mxu0 %v531
  %701 = vmatprep.subr.mxu0 0.0
  %702 = vmatpush1.msra.mxu0 %v532
  %703 = vmatprep.subr.mxu0 0.0
  %704 = vmatpush1.msra.mxu0 %v533
  %705 = vmatprep.subr.mxu0 0.0
  %706 = vmatpush1.msra.mxu0 %v534
  %707 = vmatprep.subr.mxu0 0.0
  %708 = vmatpush1.msra.mxu0 %v535
  %709 = vmatprep.subr.mxu0 0.0
  %710 = vmatpush1.msra.mxu0 %v536
  %711 = vmatprep.subr.mxu0 0.0
  %712 = vmatpush1.msra.mxu0 %v537
  %713 = vmatprep.subr.mxu0 0.0
  %714 = vmatpush1.msra.mxu0 %v538
  %715 = vmatprep.mubr.f32.mxu0 %v292
  %716 = vmatmul.mubr.f32.gmra.mrb[0].mxu0 %v291
  %v717 = vpop.f32.mrb[0].mxu0
  %v718 = vadd.f32 0.0, %v717
  %v719 = vpop.f32.mrb[0].mxu0
  %720 = vmatprep.mubr.f32.mxu0 %v301
  %721 = vmatmul.mubr.f32.gmra.mrb[0].mxu0 %v300
  %v722 = vpop.f32.mrb[0].mxu0
  %v723 = vadd.f32 0.0, %v722
  %v724 = vpop.f32.mrb[0].mxu0
  %725 = vmatprep.mubr.f32.mxu0 %v310
  %726 = vmatmul.mubr.f32.gmra.mrb[0].mxu0 %v309
  %v727 = vpop.f32.mrb[0].mxu0
  %v728 = vadd.f32 0.0, %v727
  %v729 = vpop.f32.mrb[0].mxu0
  %730 = vmatprep.mubr.f32.mxu0 %v319
  %731 = vmatmul.mubr.f32.gmra.mrb[0].mxu0 %v318
  %v732 = vpop.f32.mrb[0].mxu0
  %v733 = vadd.f32 0.0, %v732
  %v734 = vpop.f32.mrb[0].mxu0
  %735 = vmatprep.mubr.f32.mxu0 %v328
  %736 = vmatmul.mubr.f32.gmra.mrb[0].mxu0 %v327
  %v737 = vpop.f32.mrb[0].mxu0
  %v738 = vadd.f32 0.0, %v737
  %v739 = vpop.f32.mrb[0].mxu0
  %740 = vmatprep.mubr.f32.mxu0 %v337
  %741 = vmatmul.mubr.f32.gmra.mrb[0].mxu0 %v336
  %v742 = vpop.f32.mrb[0].mxu0
  %v743 = vadd.f32 0.0, %v742
  %v744 = vpop.f32.mrb[0].mxu0
  %745 = vmatprep.mubr.f32.mxu0 %v346
  %746 = vmatmul.mubr.f32.gmra.mrb[0].mxu0 %v345
  %v747 = vpop.f32.mrb[0].mxu0
  %v748 = vadd.f32 0.0, %v747
  %v749 = vpop.f32.mrb[0].mxu0
  %750 = vmatprep.mubr.f32.mxu0 %v355
  %751 = vmatmul.mubr.f32.gmra.mrb[0].mxu0 %v354
  %v752 = vpop.f32.mrb[0].mxu0
  %v753 = vadd.f32 0.0, %v752
  %v754 = vpop.f32.mrb[0].mxu0
  %755 = vmatprep.mubr.f32.mxu0 %v364
  %756 = vmatmul.mubr.f32.gmra.mrb[0].mxu0 %v363
  %v757 = vpop.f32.mrb[0].mxu0
  %v758 = vadd.f32 0.0, %v757
  %v759 = vpop.f32.mrb[0].mxu0
  %760 = vmatprep.mubr.f32.mxu0 %v373
  %761 = vmatmul.mubr.f32.gmra.mrb[0].mxu0 %v372
  %v762 = vpop.f32.mrb[0].mxu0
  %v763 = vadd.f32 0.0, %v762
  %v764 = vpop.f32.mrb[0].mxu0
  %765 = vmatprep.mubr.f32.mxu0 %v382
  %766 = vmatmul.mubr.f32.gmra.mrb[0].mxu0 %v381
  %v767 = vpop.f32.mrb[0].mxu0
  %v768 = vadd.f32 0.0, %v767
  %v769 = vpop.f32.mrb[0].mxu0
  %770 = vmatprep.mubr.f32.mxu0 %v391
  %771 = vmatmul.mubr.f32.gmra.mrb[0].mxu0 %v390
  %v772 = vpop.f32.mrb[0].mxu0
  %v773 = vadd.f32 0.0, %v772
  %v774 = vpop.f32.mrb[0].mxu0
  %775 = vmatprep.mubr.f32.mxu0 %v400
  %776 = vmatmul.mubr.f32.gmra.mrb[0].mxu0 %v399
  %v777 = vpop.f32.mrb[0].mxu0
  %v778 = vadd.f32 0.0, %v777
  %v779 = vpop.f32.mrb[0].mxu0
  %780 = vmatprep.mubr.f32.mxu0 %v409
  %781 = vmatmul.mubr.f32.gmra.mrb[0].mxu0 %v408
  %v782 = vpop.f32.mrb[0].mxu0
  %v783 = vadd.f32 0.0, %v782
  %v784 = vpop.f32.mrb[0].mxu0
  %785 = vmatprep.mubr.f32.mxu0 %v418
  %786 = vmatmul.mubr.f32.gmra.mrb[0].mxu0 %v417
  %v787 = vpop.f32.mrb[0].mxu0
  %v788 = vadd.f32 0.0, %v787
  %v789 = vpop.f32.mrb[0].mxu0
  %790 = vmatprep.mubr.f32.mxu0 %v427
  %791 = vmatmul.mubr.f32.gmra.mrb[0].mxu0 %v426
  %v792 = vpop.f32.mrb[0].mxu0
  %v793 = vadd.f32 0.0, %v792
  %v794 = vpop.f32.mrb[0].mxu0
  %795 = vmatprep.mubr.f32.mxu0 %v436
  %796 = vmatmul.mubr.f32.gmra.mrb[0].mxu0 %v435
  %v797 = vpop.f32.mrb[0].mxu0
  %v798 = vadd.f32 0.0, %v797
  %v799 = vpop.f32.mrb[0].mxu0
  %800 = vmatprep.mubr.f32.mxu0 %v445
  %801 = vmatmul.mubr.f32.gmra.mrb[0].mxu0 %v444
  %v802 = vpop.f32.mrb[0].mxu0
  %v803 = vadd.f32 0.0, %v802
  %v804 = vpop.f32.mrb[0].mxu0
  %805 = vmatprep.mubr.f32.mxu0 %v454
  %806 = vmatmul.mubr.f32.gmra.mrb[0].mxu0 %v453
  %v807 = vpop.f32.mrb[0].mxu0
  %v808 = vadd.f32 0.0, %v807
  %v809 = vpop.f32.mrb[0].mxu0
  %810 = vmatprep.mubr.f32.mxu0 %v463
  %811 = vmatmul.mubr.f32.gmra.mrb[0].mxu0 %v462
  %v812 = vpop.f32.mrb[0].mxu0
  %v813 = vadd.f32 0.0, %v812
  %v814 = vpop.f32.mrb[0].mxu0
  %815 = vmatprep.mubr.f32.mxu0 %v472
  %816 = vmatmul.mubr.f32.gmra.mrb[0].mxu0 %v471
  %v817 = vpop.f32.mrb[0].mxu0
  %v818 = vadd.f32 0.0, %v817
  %v819 = vpop.f32.mrb[0].mxu0
  %820 = vmatprep.mubr.f32.mxu0 %v481
  %821 = vmatmul.mubr.f32.gmra.mrb[0].mxu0 %v480
  %v822 = vpop.f32.mrb[0].mxu0
  %v823 = vadd.f32 0.0, %v822
  %v824 = vpop.f32.mrb[0].mxu0
  %825 = vmatprep.mubr.f32.mxu0 %v490
  %826 = vmatmul.mubr.f32.gmra.mrb[0].mxu0 %v489
  %v827 = vpop.f32.mrb[0].mxu0
  %v828 = vadd.f32 0.0, %v827
  %v829 = vpop.f32.mrb[0].mxu0
  %830 = vmatprep.mubr.f32.mxu0 %v499
  %831 = vmatmul.mubr.f32.gmra.mrb[0].mxu0 %v498
  %v832 = vpop.f32.mrb[0].mxu0
  %v833 = vadd.f32 0.0, %v832
  %v834 = vpop.f32.mrb[0].mxu0
  %835 = vdwg.mxu0
  %836 = vmatprep.subr.mxu0 0.0
  %837 = vmatpush1.msra.mxu0 %v539
  %838 = vmatprep.subr.mxu0 0.0
  %839 = vmatpush1.msra.mxu0 %v540
  %840 = vmatprep.subr.mxu0 0.0
  %841 = vmatpush1.msra.mxu0 %v541
  %842 = vmatprep.subr.mxu0 0.0
  %843 = vmatpush1.msra.mxu0 %v542
  %844 = vmatprep.subr.mxu0 0.0
  %845 = vmatpush1.msra.mxu0 %v543
  %846 = vmatprep.subr.mxu0 0.0
  %847 = vmatpush1.msra.mxu0 %v544
  %848 = vmatprep.subr.mxu0 0.0
  %849 = vmatpush1.msra.mxu0 %v545
  %850 = vmatprep.subr.mxu0 0.0
  %851 = vmatpush1.msra.mxu0 %v546
  %852 = vmatprep.subr.mxu0 0.0
  %853 = vmatpush1.msra.mxu0 %v547
  %854 = vmatprep.subr.mxu0 0.0
  %855 = vmatpush1.msra.mxu0 %v548
  %856 = vmatprep.subr.mxu0 0.0
  %857 = vmatpush1.msra.mxu0 %v549
  %858 = vmatprep.subr.mxu0 0.0
  %859 = vmatpush1.msra.mxu0 %v550
  %860 = vmatprep.subr.mxu0 0.0
  %861 = vmatpush1.msra.mxu0 %v551
  %862 = vmatprep.subr.mxu0 0.0
  %863 = vmatpush1.msra.mxu0 %v552
  %864 = vmatprep.subr.mxu0 0.0
  %865 = vmatpush1.msra.mxu0 %v553
  %866 = vmatprep.subr.mxu0 0.0
  %867 = vmatpush1.msra.mxu0 %v554
  %868 = vmatprep.subr.mxu0 0.0
  %869 = vmatpush1.msra.mxu0 %v555
  %870 = vmatprep.subr.mxu0 0.0
  %871 = vmatpush1.msra.mxu0 %v556
  %872 = vmatprep.subr.mxu0 0.0
  %873 = vmatpush1.msra.mxu0 %v557
  %874 = vmatprep.subr.mxu0 0.0
  %875 = vmatpush1.msra.mxu0 %v558
  %876 = vmatprep.subr.mxu0 0.0
  %877 = vmatpush1.msra.mxu0 %v559
  %878 = vmatprep.subr.mxu0 0.0
  %879 = vmatpush1.msra.mxu0 %v560
  %880 = vmatprep.subr.mxu0 0.0
  %881 = vmatpush1.msra.mxu0 %v561
  %882 = vmatprep.subr.mxu0 0.0
  %883 = vmatpush1.msra.mxu0 %v562
  %884 = vmatprep.subr.mxu0 0.0
  %885 = vmatpush1.msra.mxu0 %v563
  %886 = vmatprep.subr.mxu0 0.0
  %887 = vmatpush1.msra.mxu0 %v564
  %888 = vmatprep.subr.mxu0 0.0
  %889 = vmatpush1.msra.mxu0 %v565
  %890 = vmatprep.subr.mxu0 0.0
  %891 = vmatpush1.msra.mxu0 %v566
  %892 = vmatprep.subr.mxu0 0.0
  %893 = vmatpush1.msra.mxu0 %v567
  %894 = vmatprep.subr.mxu0 0.0
  %895 = vmatpush1.msra.mxu0 %v568
  %896 = vmatprep.subr.mxu0 0.0
  %897 = vmatpush1.msra.mxu0 %v569
  %898 = vmatprep.subr.mxu0 0.0
  %899 = vmatpush1.msra.mxu0 %v570
  %900 = vmatprep.mubr.f32.mxu0 %v294
  %901 = vmatmul.mubr.f32.gmra.mrb[0].mxu0 %v293
  %v902 = vpop.f32.mrb[0].mxu0
  %v903 = vadd.f32 %v718, %v902
  %v904 = vpop.f32.mrb[0].mxu0
  %905 = vmatprep.mubr.f32.mxu0 %v303
  %906 = vmatmul.mubr.f32.gmra.mrb[0].mxu0 %v302
  %v907 = vpop.f32.mrb[0].mxu0
  %v908 = vadd.f32 %v723, %v907
  %v909 = vpop.f32.mrb[0].mxu0
  %910 = vmatprep.mubr.f32.mxu0 %v312
  %911 = vmatmul.mubr.f32.gmra.mrb[0].mxu0 %v311
  %v912 = vpop.f32.mrb[0].mxu0
  %v913 = vadd.f32 %v728, %v912
  %v914 = vpop.f32.mrb[0].mxu0
  %915 = vmatprep.mubr.f32.mxu0 %v321
  %916 = vmatmul.mubr.f32.gmra.mrb[0].mxu0 %v320
  %v917 = vpop.f32.mrb[0].mxu0
  %v918 = vadd.f32 %v733, %v917
  %v919 = vpop.f32.mrb[0].mxu0
  %920 = vmatprep.mubr.f32.mxu0 %v330
  %921 = vmatmul.mubr.f32.gmra.mrb[0].mxu0 %v329
  %v922 = vpop.f32.mrb[0].mxu0
  %v923 = vadd.f32 %v738, %v922
  %v924 = vpop.f32.mrb[0].mxu0
  %925 = vmatprep.mubr.f32.mxu0 %v339
  %926 = vmatmul.mubr.f32.gmra.mrb[0].mxu0 %v338
  %v927 = vpop.f32.mrb[0].mxu0
  %v928 = vadd.f32 %v743, %v927
  %v929 = vpop.f32.mrb[0].mxu0
  %930 = vmatprep.mubr.f32.mxu0 %v348
  %931 = vmatmul.mubr.f32.gmra.mrb[0].mxu0 %v347
  %v932 = vpop.f32.mrb[0].mxu0
  %v933 = vadd.f32 %v748, %v932
  %v934 = vpop.f32.mrb[0].mxu0
  %935 = vmatprep.mubr.f32.mxu0 %v357
  %936 = vmatmul.mubr.f32.gmra.mrb[0].mxu0 %v356
  %v937 = vpop.f32.mrb[0].mxu0
  %v938 = vadd.f32 %v753, %v937
  %v939 = vpop.f32.mrb[0].mxu0
  %940 = vmatprep.mubr.f32.mxu0 %v366
  %941 = vmatmul.mubr.f32.gmra.mrb[0].mxu0 %v365
  %v942 = vpop.f32.mrb[0].mxu0
  %v943 = vadd.f32 %v758, %v942
  %v944 = vpop.f32.mrb[0].mxu0
  %945 = vmatprep.mubr.f32.mxu0 %v375
  %946 = vmatmul.mubr.f32.gmra.mrb[0].mxu0 %v374
  %v947 = vpop.f32.mrb[0].mxu0
  %v948 = vadd.f32 %v763, %v947
  %v949 = vpop.f32.mrb[0].mxu0
  %950 = vmatprep.mubr.f32.mxu0 %v384
  %951 = vmatmul.mubr.f32.gmra.mrb[0].mxu0 %v383
  %v952 = vpop.f32.mrb[0].mxu0
  %v953 = vadd.f32 %v768, %v952
  %v954 = vpop.f32.mrb[0].mxu0
  %955 = vmatprep.mubr.f32.mxu0 %v393
  %956 = vmatmul.mubr.f32.gmra.mrb[0].mxu0 %v392
  %v957 = vpop.f32.mrb[0].mxu0
  %v958 = vadd.f32 %v773, %v957
  %v959 = vpop.f32.mrb[0].mxu0
  %960 = vmatprep.mubr.f32.mxu0 %v402
  %961 = vmatmul.mubr.f32.gmra.mrb[0].mxu0 %v401
  %v962 = vpop.f32.mrb[0].mxu0
  %v963 = vadd.f32 %v778, %v962
  %v964 = vpop.f32.mrb[0].mxu0
  %965 = vmatprep.mubr.f32.mxu0 %v411
  %966 = vmatmul.mubr.f32.gmra.mrb[0].mxu0 %v410
  %v967 = vpop.f32.mrb[0].mxu0
  %v968 = vadd.f32 %v783, %v967
  %v969 = vpop.f32.mrb[0].mxu0
  %970 = vmatprep.mubr.f32.mxu0 %v420
  %971 = vmatmul.mubr.f32.gmra.mrb[0].mxu0 %v419
  %v972 = vpop.f32.mrb[0].mxu0
  %v973 = vadd.f32 %v788, %v972
  %v974 = vpop.f32.mrb[0].mxu0
  %975 = vmatprep.mubr.f32.mxu0 %v429
  %976 = vmatmul.mubr.f32.gmra.mrb[0].mxu0 %v428
  %v977 = vpop.f32.mrb[0].mxu0
  %v978 = vadd.f32 %v793, %v977
  %v979 = vpop.f32.mrb[0].mxu0
  %980 = vmatprep.mubr.f32.mxu0 %v438
  %981 = vmatmul.mubr.f32.gmra.mrb[0].mxu0 %v437
  %v982 = vpop.f32.mrb[0].mxu0
  %v983 = vadd.f32 %v798, %v982
  %v984 = vpop.f32.mrb[0].mxu0
  %985 = vmatprep.mubr.f32.mxu0 %v447
  %986 = vmatmul.mubr.f32.gmra.mrb[0].mxu0 %v446
  %v987 = vpop.f32.mrb[0].mxu0
  %v988 = vadd.f32 %v803, %v987
  %v989 = vpop.f32.mrb[0].mxu0
  %990 = vmatprep.mubr.f32.mxu0 %v456
  %991 = vmatmul.mubr.f32.gmra.mrb[0].mxu0 %v455
  %v992 = vpop.f32.mrb[0].mxu0
  %v993 = vadd.f32 %v808, %v992
  %v994 = vpop.f32.mrb[0].mxu0
  %995 = vmatprep.mubr.f32.mxu0 %v465
  %996 = vmatmul.mubr.f32.gmra.mrb[0].mxu0 %v464
  %v997 = vpop.f32.mrb[0].mxu0
  %v998 = vadd.f32 %v813, %v997
  %v999 = vpop.f32.mrb[0].mxu0
  %1000 = vmatprep.mubr.f32.mxu0 %v474
  %1001 = vmatmul.mubr.f32.gmra.mrb[0].mxu0 %v473
  %v1002 = vpop.f32.mrb[0].mxu0
  %v1003 = vadd.f32 %v818, %v1002
  %v1004 = vpop.f32.mrb[0].mxu0
  %1005 = vmatprep.mubr.f32.mxu0 %v483
  %1006 = vmatmul.mubr.f32.gmra.mrb[0].mxu0 %v482
  %v1007 = vpop.f32.mrb[0].mxu0
  %v1008 = vadd.f32 %v823, %v1007
  %v1009 = vpop.f32.mrb[0].mxu0
  %1010 = vmatprep.mubr.f32.mxu0 %v492
  %1011 = vmatmul.mubr.f32.gmra.mrb[0].mxu0 %v491
  %v1012 = vpop.f32.mrb[0].mxu0
  %v1013 = vadd.f32 %v828, %v1012
  %v1014 = vpop.f32.mrb[0].mxu0
  %1015 = vmatprep.mubr.f32.mxu0 %v501
  %1016 = vmatmul.mubr.f32.gmra.mrb[0].mxu0 %v500
  %v1017 = vpop.f32.mrb[0].mxu0
  %v1018 = vadd.f32 %v833, %v1017
  %v1019 = vpop.f32.mrb[0].mxu0
  %1020 = vdwg.mxu0
  %1021 = vmatprep.subr.mxu0 0.0
  %1022 = vmatpush1.msra.mxu0 %v571
  %1023 = vmatprep.subr.mxu0 0.0
  %1024 = vmatpush1.msra.mxu0 %v572
  %1025 = vmatprep.subr.mxu0 0.0
  %1026 = vmatpush1.msra.mxu0 %v573
  %1027 = vmatprep.subr.mxu0 0.0
  %1028 = vmatpush1.msra.mxu0 %v574
  %1029 = vmatprep.subr.mxu0 0.0
  %1030 = vmatpush1.msra.mxu0 %v575
  %1031 = vmatprep.subr.mxu0 0.0
  %1032 = vmatpush1.msra.mxu0 %v576
  %1033 = vmatprep.subr.mxu0 0.0
  %1034 = vmatpush1.msra.mxu0 %v577
  %1035 = vmatprep.subr.mxu0 0.0
  %1036 = vmatpush1.msra.mxu0 %v578
  %1037 = vmatprep.subr.mxu0 0.0
  %1038 = vmatpush1.msra.mxu0 %v579
  %1039 = vmatprep.subr.mxu0 0.0
  %1040 = vmatpush1.msra.mxu0 %v580
  %1041 = vmatprep.subr.mxu0 0.0
  %1042 = vmatpush1.msra.mxu0 %v581
  %1043 = vmatprep.subr.mxu0 0.0
  %1044 = vmatpush1.msra.mxu0 %v582
  %1045 = vmatprep.subr.mxu0 0.0
  %1046 = vmatpush1.msra.mxu0 %v583
  %1047 = vmatprep.subr.mxu0 0.0
  %1048 = vmatpush1.msra.mxu0 %v584
  %1049 = vmatprep.subr.mxu0 0.0
  %1050 = vmatpush1.msra.mxu0 %v585
  %1051 = vmatprep.subr.mxu0 0.0
  %1052 = vmatpush1.msra.mxu0 %v586
  %1053 = vmatprep.subr.mxu0 0.0
  %1054 = vmatpush1.msra.mxu0 %v587
  %1055 = vmatprep.subr.mxu0 0.0
  %1056 = vmatpush1.msra.mxu0 %v588
  %1057 = vmatprep.subr.mxu0 0.0
  %1058 = vmatpush1.msra.mxu0 %v589
  %1059 = vmatprep.subr.mxu0 0.0
  %1060 = vmatpush1.msra.mxu0 %v590
  %1061 = vmatprep.subr.mxu0 0.0
  %1062 = vmatpush1.msra.mxu0 %v591
  %1063 = vmatprep.subr.mxu0 0.0
  %1064 = vmatpush1.msra.mxu0 %v592
  %1065 = vmatprep.subr.mxu0 0.0
  %1066 = vmatpush1.msra.mxu0 %v593
  %1067 = vmatprep.subr.mxu0 0.0
  %1068 = vmatpush1.msra.mxu0 %v594
  %1069 = vmatprep.subr.mxu0 0.0
  %1070 = vmatpush1.msra.mxu0 %v595
  %1071 = vmatprep.subr.mxu0 0.0
  %1072 = vmatpush1.msra.mxu0 %v596
  %1073 = vmatprep.subr.mxu0 0.0
  %1074 = vmatpush1.msra.mxu0 %v597
  %1075 = vmatprep.subr.mxu0 0.0
  %1076 = vmatpush1.msra.mxu0 %v598
  %1077 = vmatprep.subr.mxu0 0.0
  %1078 = vmatpush1.msra.mxu0 %v599
  %1079 = vmatprep.subr.mxu0 0.0
  %1080 = vmatpush1.msra.mxu0 %v600
  %1081 = vmatprep.subr.mxu0 0.0
  %1082 = vmatpush1.msra.mxu0 %v601
  %1083 = vmatprep.subr.mxu0 0.0
  %1084 = vmatpush1.msra.mxu0 %v602
  %1085 = vmatprep.mubr.f32.mxu0 %v296
  %1086 = vmatmul.mubr.f32.gmra.mrb[0].mxu0 %v295
  %v1087 = vpop.f32.mrb[0].mxu0
  %v1088 = vadd.f32 %v903, %v1087
  %v1089 = vpop.f32.mrb[0].mxu0
  %1090 = vmatprep.mubr.f32.mxu0 %v305
  %1091 = vmatmul.mubr.f32.gmra.mrb[0].mxu0 %v304
  %v1092 = vpop.f32.mrb[0].mxu0
  %v1093 = vadd.f32 %v908, %v1092
  %v1094 = vpop.f32.mrb[0].mxu0
  %1095 = vmatprep.mubr.f32.mxu0 %v314
  %1096 = vmatmul.mubr.f32.gmra.mrb[0].mxu0 %v313
  %v1097 = vpop.f32.mrb[0].mxu0
  %v1098 = vadd.f32 %v913, %v1097
  %v1099 = vpop.f32.mrb[0].mxu0
  %1100 = vmatprep.mubr.f32.mxu0 %v323
  %1101 = vmatmul.mubr.f32.gmra.mrb[0].mxu0 %v322
  %v1102 = vpop.f32.mrb[0].mxu0
  %v1103 = vadd.f32 %v918, %v1102
  %v1104 = vpop.f32.mrb[0].mxu0
  %1105 = vmatprep.mubr.f32.mxu0 %v332
  %1106 = vmatmul.mubr.f32.gmra.mrb[0].mxu0 %v331
  %v1107 = vpop.f32.mrb[0].mxu0
  %v1108 = vadd.f32 %v923, %v1107
  %v1109 = vpop.f32.mrb[0].mxu0
  %1110 = vmatprep.mubr.f32.mxu0 %v341
  %1111 = vmatmul.mubr.f32.gmra.mrb[0].mxu0 %v340
  %v1112 = vpop.f32.mrb[0].mxu0
  %v1113 = vadd.f32 %v928, %v1112
  %v1114 = vpop.f32.mrb[0].mxu0
  %1115 = vmatprep.mubr.f32.mxu0 %v350
  %1116 = vmatmul.mubr.f32.gmra.mrb[0].mxu0 %v349
  %v1117 = vpop.f32.mrb[0].mxu0
  %v1118 = vadd.f32 %v933, %v1117
  %v1119 = vpop.f32.mrb[0].mxu0
  %1120 = vmatprep.mubr.f32.mxu0 %v359
  %1121 = vmatmul.mubr.f32.gmra.mrb[0].mxu0 %v358
  %v1122 = vpop.f32.mrb[0].mxu0
  %v1123 = vadd.f32 %v938, %v1122
  %v1124 = vpop.f32.mrb[0].mxu0
  %1125 = vmatprep.mubr.f32.mxu0 %v368
  %1126 = vmatmul.mubr.f32.gmra.mrb[0].mxu0 %v367
  %v1127 = vpop.f32.mrb[0].mxu0
  %v1128 = vadd.f32 %v943, %v1127
  %v1129 = vpop.f32.mrb[0].mxu0
  %1130 = vmatprep.mubr.f32.mxu0 %v377
  %1131 = vmatmul.mubr.f32.gmra.mrb[0].mxu0 %v376
  %v1132 = vpop.f32.mrb[0].mxu0
  %v1133 = vadd.f32 %v948, %v1132
  %v1134 = vpop.f32.mrb[0].mxu0
  %1135 = vmatprep.mubr.f32.mxu0 %v386
  %1136 = vmatmul.mubr.f32.gmra.mrb[0].mxu0 %v385
  %v1137 = vpop.f32.mrb[0].mxu0
  %v1138 = vadd.f32 %v953, %v1137
  %v1139 = vpop.f32.mrb[0].mxu0
  %1140 = vmatprep.mubr.f32.mxu0 %v395
  %1141 = vmatmul.mubr.f32.gmra.mrb[0].mxu0 %v394
  %v1142 = vpop.f32.mrb[0].mxu0
  %v1143 = vadd.f32 %v958, %v1142
  %v1144 = vpop.f32.mrb[0].mxu0
  %1145 = vmatprep.mubr.f32.mxu0 %v404
  %1146 = vmatmul.mubr.f32.gmra.mrb[0].mxu0 %v403
  %v1147 = vpop.f32.mrb[0].mxu0
  %v1148 = vadd.f32 %v963, %v1147
  %v1149 = vpop.f32.mrb[0].mxu0
  %1150 = vmatprep.mubr.f32.mxu0 %v413
  %1151 = vmatmul.mubr.f32.gmra.mrb[0].mxu0 %v412
  %v1152 = vpop.f32.mrb[0].mxu0
  %v1153 = vadd.f32 %v968, %v1152
  %v1154 = vpop.f32.mrb[0].mxu0
  %1155 = vmatprep.mubr.f32.mxu0 %v422
  %1156 = vmatmul.mubr.f32.gmra.mrb[0].mxu0 %v421
  %v1157 = vpop.f32.mrb[0].mxu0
  %v1158 = vadd.f32 %v973, %v1157
  %v1159 = vpop.f32.mrb[0].mxu0
  %1160 = vmatprep.mubr.f32.mxu0 %v431
  %1161 = vmatmul.mubr.f32.gmra.mrb[0].mxu0 %v430
  %v1162 = vpop.f32.mrb[0].mxu0
  %v1163 = vadd.f32 %v978, %v1162
  %v1164 = vpop.f32.mrb[0].mxu0
  %1165 = vmatprep.mubr.f32.mxu0 %v440
  %1166 = vmatmul.mubr.f32.gmra.mrb[0].mxu0 %v439
  %v1167 = vpop.f32.mrb[0].mxu0
  %v1168 = vadd.f32 %v983, %v1167
  %v1169 = vpop.f32.mrb[0].mxu0
  %1170 = vmatprep.mubr.f32.mxu0 %v449
  %1171 = vmatmul.mubr.f32.gmra.mrb[0].mxu0 %v448
  %v1172 = vpop.f32.mrb[0].mxu0
  %v1173 = vadd.f32 %v988, %v1172
  %v1174 = vpop.f32.mrb[0].mxu0
  %1175 = vmatprep.mubr.f32.mxu0 %v458
  %1176 = vmatmul.mubr.f32.gmra.mrb[0].mxu0 %v457
  %v1177 = vpop.f32.mrb[0].mxu0
  %v1178 = vadd.f32 %v993, %v1177
  %v1179 = vpop.f32.mrb[0].mxu0
  %1180 = vmatprep.mubr.f32.mxu0 %v467
  %1181 = vmatmul.mubr.f32.gmra.mrb[0].mxu0 %v466
  %v1182 = vpop.f32.mrb[0].mxu0
  %v1183 = vadd.f32 %v998, %v1182
  %v1184 = vpop.f32.mrb[0].mxu0
  %1185 = vmatprep.mubr.f32.mxu0 %v476
  %1186 = vmatmul.mubr.f32.gmra.mrb[0].mxu0 %v475
  %v1187 = vpop.f32.mrb[0].mxu0
  %v1188 = vadd.f32 %v1003, %v1187
  %v1189 = vpop.f32.mrb[0].mxu0
  %1190 = vmatprep.mubr.f32.mxu0 %v485
  %1191 = vmatmul.mubr.f32.gmra.mrb[0].mxu0 %v484
  %v1192 = vpop.f32.mrb[0].mxu0
  %v1193 = vadd.f32 %v1008, %v1192
  %v1194 = vpop.f32.mrb[0].mxu0
  %1195 = vmatprep.mubr.f32.mxu0 %v494
  %1196 = vmatmul.mubr.f32.gmra.mrb[0].mxu0 %v493
  %v1197 = vpop.f32.mrb[0].mxu0
  %v1198 = vadd.f32 %v1013, %v1197
  %v1199 = vpop.f32.mrb[0].mxu0
  %1200 = vmatprep.mubr.f32.mxu0 %v503
  %1201 = vmatmul.mubr.f32.gmra.mrb[0].mxu0 %v502
  %v1202 = vpop.f32.mrb[0].mxu0
  %v1203 = vadd.f32 %v1018, %v1202
  %v1204 = vpop.f32.mrb[0].mxu0
  %1205 = vdwg.mxu0
  %1206 = vmatprep.subr.mxu0 0.0
  %1207 = vmatpush1.msra.mxu0 %v603
  %1208 = vmatprep.subr.mxu0 0.0
  %1209 = vmatpush1.msra.mxu0 %v604
  %1210 = vmatprep.subr.mxu0 0.0
  %1211 = vmatpush1.msra.mxu0 %v605
  %1212 = vmatprep.subr.mxu0 0.0
  %1213 = vmatpush1.msra.mxu0 %v606
  %1214 = vmatprep.subr.mxu0 0.0
  %1215 = vmatpush1.msra.mxu0 %v607
  %1216 = vmatprep.subr.mxu0 0.0
  %1217 = vmatpush1.msra.mxu0 %v608
  %1218 = vmatprep.subr.mxu0 0.0
  %1219 = vmatpush1.msra.mxu0 %v609
  %1220 = vmatprep.subr.mxu0 0.0
  %1221 = vmatpush1.msra.mxu0 %v610
  %1222 = vmatprep.subr.mxu0 0.0
  %1223 = vmatpush1.msra.mxu0 %v611
  %1224 = vmatprep.subr.mxu0 0.0
  %1225 = vmatpush1.msra.mxu0 %v612
  %1226 = vmatprep.subr.mxu0 0.0
  %1227 = vmatpush1.msra.mxu0 %v613
  %1228 = vmatprep.subr.mxu0 0.0
  %1229 = vmatpush1.msra.mxu0 %v614
  %1230 = vmatprep.subr.mxu0 0.0
  %1231 = vmatpush1.msra.mxu0 %v615
  %1232 = vmatprep.subr.mxu0 0.0
  %1233 = vmatpush1.msra.mxu0 %v616
  %1234 = vmatprep.subr.mxu0 0.0
  %1235 = vmatpush1.msra.mxu0 %v617
  %1236 = vmatprep.subr.mxu0 0.0
  %1237 = vmatpush1.msra.mxu0 %v618
  %1238 = vmatprep.subr.mxu0 0.0
  %1239 = vmatpush1.msra.mxu0 %v619
  %1240 = vmatprep.subr.mxu0 0.0
  %1241 = vmatpush1.msra.mxu0 %v620
  %1242 = vmatprep.subr.mxu0 0.0
  %1243 = vmatpush1.msra.mxu0 %v621
  %1244 = vmatprep.subr.mxu0 0.0
  %1245 = vmatpush1.msra.mxu0 %v622
  %1246 = vmatprep.subr.mxu0 0.0
  %1247 = vmatpush1.msra.mxu0 %v623
  %1248 = vmatprep.subr.mxu0 0.0
  %1249 = vmatpush1.msra.mxu0 %v624
  %1250 = vmatprep.subr.mxu0 0.0
  %1251 = vmatpush1.msra.mxu0 %v625
  %1252 = vmatprep.subr.mxu0 0.0
  %1253 = vmatpush1.msra.mxu0 %v626
  %1254 = vmatprep.subr.mxu0 0.0
  %1255 = vmatpush1.msra.mxu0 %v627
  %1256 = vmatprep.subr.mxu0 0.0
  %1257 = vmatpush1.msra.mxu0 %v628
  %1258 = vmatprep.subr.mxu0 0.0
  %1259 = vmatpush1.msra.mxu0 %v629
  %1260 = vmatprep.subr.mxu0 0.0
  %1261 = vmatpush1.msra.mxu0 %v630
  %1262 = vmatprep.subr.mxu0 0.0
  %1263 = vmatpush1.msra.mxu0 %v631
  %1264 = vmatprep.subr.mxu0 0.0
  %1265 = vmatpush1.msra.mxu0 %v632
  %1266 = vmatprep.subr.mxu0 0.0
  %1267 = vmatpush1.msra.mxu0 %v633
  %1268 = vmatprep.subr.mxu0 0.0
  %1269 = vmatpush1.msra.mxu0 %v634
  %1270 = vmatprep.mubr.f32.mxu0 %v298
  %1271 = vmatmul.mubr.f32.gmra.mrb[0].mxu0 %v297
  %v1272 = vpop.f32.mrb[0].mxu0
  %v1273 = vadd.f32 %v1088, %v1272
  %v1274 = vpop.f32.mrb[0].mxu0
  %1275 = vmatprep.mubr.f32.mxu0 %v307
  %1276 = vmatmul.mubr.f32.gmra.mrb[0].mxu0 %v306
  %v1277 = vpop.f32.mrb[0].mxu0
  %v1278 = vadd.f32 %v1093, %v1277
  %v1279 = vpop.f32.mrb[0].mxu0
  %1280 = vmatprep.mubr.f32.mxu0 %v316
  %1281 = vmatmul.mubr.f32.gmra.mrb[0].mxu0 %v315
  %v1282 = vpop.f32.mrb[0].mxu0
  %v1283 = vadd.f32 %v1098, %v1282
  %v1284 = vpop.f32.mrb[0].mxu0
  %1285 = vmatprep.mubr.f32.mxu0 %v325
  %1286 = vmatmul.mubr.f32.gmra.mrb[0].mxu0 %v324
  %v1287 = vpop.f32.mrb[0].mxu0
  %v1288 = vadd.f32 %v1103, %v1287
  %v1289 = vpop.f32.mrb[0].mxu0
  %1290 = vmatprep.mubr.f32.mxu0 %v334
  %1291 = vmatmul.mubr.f32.gmra.mrb[0].mxu0 %v333
  %v1292 = vpop.f32.mrb[0].mxu0
  %v1293 = vadd.f32 %v1108, %v1292
  %v1294 = vpop.f32.mrb[0].mxu0
  %1295 = vmatprep.mubr.f32.mxu0 %v343
  %1296 = vmatmul.mubr.f32.gmra.mrb[0].mxu0 %v342
  %v1297 = vpop.f32.mrb[0].mxu0
  %v1298 = vadd.f32 %v1113, %v1297
  %v1299 = vpop.f32.mrb[0].mxu0
  %1300 = vmatprep.mubr.f32.mxu0 %v352
  %1301 = vmatmul.mubr.f32.gmra.mrb[0].mxu0 %v351
  %v1302 = vpop.f32.mrb[0].mxu0
  %v1303 = vadd.f32 %v1118, %v1302
  %v1304 = vpop.f32.mrb[0].mxu0
  %1305 = vmatprep.mubr.f32.mxu0 %v361
  %1306 = vmatmul.mubr.f32.gmra.mrb[0].mxu0 %v360
  %v1307 = vpop.f32.mrb[0].mxu0
  %v1308 = vadd.f32 %v1123, %v1307
  %v1309 = vpop.f32.mrb[0].mxu0
  %1310 = vmatprep.mubr.f32.mxu0 %v370
  %1311 = vmatmul.mubr.f32.gmra.mrb[0].mxu0 %v369
  %v1312 = vpop.f32.mrb[0].mxu0
  %v1313 = vadd.f32 %v1128, %v1312
  %v1314 = vpop.f32.mrb[0].mxu0
  %1315 = vmatprep.mubr.f32.mxu0 %v379
  %1316 = vmatmul.mubr.f32.gmra.mrb[0].mxu0 %v378
  %v1317 = vpop.f32.mrb[0].mxu0
  %v1318 = vadd.f32 %v1133, %v1317
  %v1319 = vpop.f32.mrb[0].mxu0
  %1320 = vmatprep.mubr.f32.mxu0 %v388
  %1321 = vmatmul.mubr.f32.gmra.mrb[0].mxu0 %v387
  %v1322 = vpop.f32.mrb[0].mxu0
  %v1323 = vadd.f32 %v1138, %v1322
  %v1324 = vpop.f32.mrb[0].mxu0
  %1325 = vmatprep.mubr.f32.mxu0 %v397
  %1326 = vmatmul.mubr.f32.gmra.mrb[0].mxu0 %v396
  %v1327 = vpop.f32.mrb[0].mxu0
  %v1328 = vadd.f32 %v1143, %v1327
  %v1329 = vpop.f32.mrb[0].mxu0
  %1330 = vmatprep.mubr.f32.mxu0 %v406
  %1331 = vmatmul.mubr.f32.gmra.mrb[0].mxu0 %v405
  %v1332 = vpop.f32.mrb[0].mxu0
  %v1333 = vadd.f32 %v1148, %v1332
  %v1334 = vpop.f32.mrb[0].mxu0
  %1335 = vmatprep.mubr.f32.mxu0 %v415
  %1336 = vmatmul.mubr.f32.gmra.mrb[0].mxu0 %v414
  %v1337 = vpop.f32.mrb[0].mxu0
  %v1338 = vadd.f32 %v1153, %v1337
  %v1339 = vpop.f32.mrb[0].mxu0
  %1340 = vmatprep.mubr.f32.mxu0 %v424
  %1341 = vmatmul.mubr.f32.gmra.mrb[0].mxu0 %v423
  %v1342 = vpop.f32.mrb[0].mxu0
  %v1343 = vadd.f32 %v1158, %v1342
  %v1344 = vpop.f32.mrb[0].mxu0
  %1345 = vmatprep.mubr.f32.mxu0 %v433
  %1346 = vmatmul.mubr.f32.gmra.mrb[0].mxu0 %v432
  %v1347 = vpop.f32.mrb[0].mxu0
  %v1348 = vadd.f32 %v1163, %v1347
  %v1349 = vpop.f32.mrb[0].mxu0
  %1350 = vmatprep.mubr.f32.mxu0 %v442
  %1351 = vmatmul.mubr.f32.gmra.mrb[0].mxu0 %v441
  %v1352 = vpop.f32.mrb[0].mxu0
  %v1353 = vadd.f32 %v1168, %v1352
  %v1354 = vpop.f32.mrb[0].mxu0
  %1355 = vmatprep.mubr.f32.mxu0 %v451
  %1356 = vmatmul.mubr.f32.gmra.mrb[0].mxu0 %v450
  %v1357 = vpop.f32.mrb[0].mxu0
  %v1358 = vadd.f32 %v1173, %v1357
  %v1359 = vpop.f32.mrb[0].mxu0
  %1360 = vmatprep.mubr.f32.mxu0 %v460
  %1361 = vmatmul.mubr.f32.gmra.mrb[0].mxu0 %v459
  %v1362 = vpop.f32.mrb[0].mxu0
  %v1363 = vadd.f32 %v1178, %v1362
  %v1364 = vpop.f32.mrb[0].mxu0
  %1365 = vmatprep.mubr.f32.mxu0 %v469
  %1366 = vmatmul.mubr.f32.gmra.mrb[0].mxu0 %v468
  %v1367 = vpop.f32.mrb[0].mxu0
  %v1368 = vadd.f32 %v1183, %v1367
  %v1369 = vpop.f32.mrb[0].mxu0
  %1370 = vmatprep.mubr.f32.mxu0 %v478
  %1371 = vmatmul.mubr.f32.gmra.mrb[0].mxu0 %v477
  %v1372 = vpop.f32.mrb[0].mxu0
  %v1373 = vadd.f32 %v1188, %v1372
  %v1374 = vpop.f32.mrb[0].mxu0
  %1375 = vmatprep.mubr.f32.mxu0 %v487
  %1376 = vmatmul.mubr.f32.gmra.mrb[0].mxu0 %v486
  %v1377 = vpop.f32.mrb[0].mxu0
  %v1378 = vadd.f32 %v1193, %v1377
  %v1379 = vpop.f32.mrb[0].mxu0
  %1380 = vmatprep.mubr.f32.mxu0 %v496
  %1381 = vmatmul.mubr.f32.gmra.mrb[0].mxu0 %v495
  %v1382 = vpop.f32.mrb[0].mxu0
  %v1383 = vadd.f32 %v1198, %v1382
  %v1384 = vpop.f32.mrb[0].mxu0
  %1385 = vmatprep.mubr.f32.mxu0 %v505
  %1386 = vmatmul.mubr.f32.gmra.mrb[0].mxu0 %v504
  %v1387 = vpop.f32.mrb[0].mxu0
  %v1388 = vadd.f32 %v1203, %v1387
  %v1389 = vpop.f32.mrb[0].mxu0
  %1390 = vdwg.mxu0
  %1391 = vmatprep.subr.mxu0 0.0
  %1392 = vmatpush1.msra.mxu0 %v635
  %1393 = vmatprep.subr.mxu0 0.0
  %1394 = vmatpush1.msra.mxu0 %v636
  %1395 = vmatprep.subr.mxu0 0.0
  %1396 = vmatpush1.msra.mxu0 %v637
  %1397 = vmatprep.subr.mxu0 0.0
  %1398 = vmatpush1.msra.mxu0 %v638
  %1399 = vmatprep.subr.mxu0 0.0
  %1400 = vmatpush1.msra.mxu0 %v639
  %1401 = vmatprep.subr.mxu0 0.0
  %1402 = vmatpush1.msra.mxu0 %v640
  %1403 = vmatprep.subr.mxu0 0.0
  %1404 = vmatpush1.msra.mxu0 %v641
  %1405 = vmatprep.subr.mxu0 0.0
  %1406 = vmatpush1.msra.mxu0 %v642
  %1407 = vmatprep.subr.mxu0 0.0
  %1408 = vmatpush1.msra.mxu0 %v643
  %1409 = vmatprep.subr.mxu0 0.0
  %1410 = vmatpush1.msra.mxu0 %v644
  %1411 = vmatprep.subr.mxu0 0.0
  %1412 = vmatpush1.msra.mxu0 %v645
  %1413 = vmatprep.subr.mxu0 0.0
  %1414 = vmatpush1.msra.mxu0 %v646
  %1415 = vmatprep.subr.mxu0 0.0
  %1416 = vmatpush1.msra.mxu0 %v647
  %1417 = vmatprep.subr.mxu0 0.0
  %1418 = vmatpush1.msra.mxu0 %v648
  %1419 = vmatprep.subr.mxu0 0.0
  %1420 = vmatpush1.msra.mxu0 %v649
  %1421 = vmatprep.subr.mxu0 0.0
  %1422 = vmatpush1.msra.mxu0 %v650
  %1423 = vmatprep.subr.mxu0 0.0
  %1424 = vmatpush1.msra.mxu0 0.0
  %1425 = vmatprep.subr.mxu0 0.0
  %1426 = vmatpush1.msra.mxu0 0.0
  %1427 = vmatprep.subr.mxu0 0.0
  %1428 = vmatpush1.msra.mxu0 0.0
  %1429 = vmatprep.subr.mxu0 0.0
  %1430 = vmatpush1.msra.mxu0 0.0
  %1431 = vmatprep.subr.mxu0 0.0
  %1432 = vmatpush1.msra.mxu0 0.0
  %1433 = vmatprep.subr.mxu0 0.0
  %1434 = vmatpush1.msra.mxu0 0.0
  %1435 = vmatprep.subr.mxu0 0.0
  %1436 = vmatpush1.msra.mxu0 0.0
  %1437 = vmatprep.subr.mxu0 0.0
  %1438 = vmatpush1.msra.mxu0 0.0
  %1439 = vmatprep.subr.mxu0 0.0
  %1440 = vmatpush1.msra.mxu0 0.0
  %1441 = vmatprep.subr.mxu0 0.0
  %1442 = vmatpush1.msra.mxu0 0.0
  %1443 = vmatprep.subr.mxu0 0.0
  %1444 = vmatpush1.msra.mxu0 0.0
  %1445 = vmatprep.subr.mxu0 0.0
  %1446 = vmatpush1.msra.mxu0 0.0
  %1447 = vmatprep.subr.mxu0 0.0
  %1448 = vmatpush1.msra.mxu0 0.0
  %1449 = vmatprep.subr.mxu0 0.0
  %1450 = vmatpush1.msra.mxu0 0.0
  %1451 = vmatprep.subr.mxu0 0.0
  %1452 = vmatpush1.msra.mxu0 0.0
  %1453 = vmatprep.subr.mxu0 0.0
  %1454 = vmatpush1.msra.mxu0 0.0
  %1455 = vmatprep.mubr.f32.mxu0 0.0
  %1456 = vmatmul.mubr.f32.gmra.mrb[0].mxu0 %v299
  %v1457 = vpop.f32.mrb[0].mxu0
  %v1458 = vadd.f32 %v1273, %v1457
  %v1459 = vpop.f32.mrb[0].mxu0
  %1460 = vmatprep.mubr.f32.mxu0 0.0
  %1461 = vmatmul.mubr.f32.gmra.mrb[0].mxu0 %v308
  %v1462 = vpop.f32.mrb[0].mxu0
  %v1463 = vadd.f32 %v1278, %v1462
  %v1464 = vpop.f32.mrb[0].mxu0
  %1465 = vmatprep.mubr.f32.mxu0 0.0
  %1466 = vmatmul.mubr.f32.gmra.mrb[0].mxu0 %v317
  %v1467 = vpop.f32.mrb[0].mxu0
  %v1468 = vadd.f32 %v1283, %v1467
  %v1469 = vpop.f32.mrb[0].mxu0
  %1470 = vmatprep.mubr.f32.mxu0 0.0
  %1471 = vmatmul.mubr.f32.gmra.mrb[0].mxu0 %v326
  %v1472 = vpop.f32.mrb[0].mxu0
  %v1473 = vadd.f32 %v1288, %v1472
  %v1474 = vpop.f32.mrb[0].mxu0
  %1475 = vmatprep.mubr.f32.mxu0 0.0
  %1476 = vmatmul.mubr.f32.gmra.mrb[0].mxu0 %v335
  %v1477 = vpop.f32.mrb[0].mxu0
  %v1478 = vadd.f32 %v1293, %v1477
  %v1479 = vpop.f32.mrb[0].mxu0
  %1480 = vmatprep.mubr.f32.mxu0 0.0
  %1481 = vmatmul.mubr.f32.gmra.mrb[0].mxu0 %v344
  %v1482 = vpop.f32.mrb[0].mxu0
  %v1483 = vadd.f32 %v1298, %v1482
  %v1484 = vpop.f32.mrb[0].mxu0
  %1485 = vmatprep.mubr.f32.mxu0 0.0
  %1486 = vmatmul.mubr.f32.gmra.mrb[0].mxu0 %v353
  %v1487 = vpop.f32.mrb[0].mxu0
  %v1488 = vadd.f32 %v1303, %v1487
  %v1489 = vpop.f32.mrb[0].mxu0
  %1490 = vmatprep.mubr.f32.mxu0 0.0
  %1491 = vmatmul.mubr.f32.gmra.mrb[0].mxu0 %v362
  %v1492 = vpop.f32.mrb[0].mxu0
  %v1493 = vadd.f32 %v1308, %v1492
  %v1494 = vpop.f32.mrb[0].mxu0
  %1495 = vmatprep.mubr.f32.mxu0 0.0
  %1496 = vmatmul.mubr.f32.gmra.mrb[0].mxu0 %v371
  %v1497 = vpop.f32.mrb[0].mxu0
  %v1498 = vadd.f32 %v1313, %v1497
  %v1499 = vpop.f32.mrb[0].mxu0
  %1500 = vmatprep.mubr.f32.mxu0 0.0
  %1501 = vmatmul.mubr.f32.gmra.mrb[0].mxu0 %v380
  %v1502 = vpop.f32.mrb[0].mxu0
  %v1503 = vadd.f32 %v1318, %v1502
  %v1504 = vpop.f32.mrb[0].mxu0
  %1505 = vmatprep.mubr.f32.mxu0 0.0
  %1506 = vmatmul.mubr.f32.gmra.mrb[0].mxu0 %v389
  %v1507 = vpop.f32.mrb[0].mxu0
  %v1508 = vadd.f32 %v1323, %v1507
  %v1509 = vpop.f32.mrb[0].mxu0
  %1510 = vmatprep.mubr.f32.mxu0 0.0
  %1511 = vmatmul.mubr.f32.gmra.mrb[0].mxu0 %v398
  %v1512 = vpop.f32.mrb[0].mxu0
  %v1513 = vadd.f32 %v1328, %v1512
  %v1514 = vpop.f32.mrb[0].mxu0
  %1515 = vmatprep.mubr.f32.mxu0 0.0
  %1516 = vmatmul.mubr.f32.gmra.mrb[0].mxu0 %v407
  %v1517 = vpop.f32.mrb[0].mxu0
  %v1518 = vadd.f32 %v1333, %v1517
  %v1519 = vpop.f32.mrb[0].mxu0
  %1520 = vmatprep.mubr.f32.mxu0 0.0
  %1521 = vmatmul.mubr.f32.gmra.mrb[0].mxu0 %v416
  %v1522 = vpop.f32.mrb[0].mxu0
  %v1523 = vadd.f32 %v1338, %v1522
  %v1524 = vpop.f32.mrb[0].mxu0
  %1525 = vmatprep.mubr.f32.mxu0 0.0
  %1526 = vmatmul.mubr.f32.gmra.mrb[0].mxu0 %v425
  %v1527 = vpop.f32.mrb[0].mxu0
  %v1528 = vadd.f32 %v1343, %v1527
  %v1529 = vpop.f32.mrb[0].mxu0
  %1530 = vmatprep.mubr.f32.mxu0 0.0
  %1531 = vmatmul.mubr.f32.gmra.mrb[0].mxu0 %v434
  %v1532 = vpop.f32.mrb[0].mxu0
  %v1533 = vadd.f32 %v1348, %v1532
  %v1534 = vpop.f32.mrb[0].mxu0
  %1535 = vmatprep.mubr.f32.mxu0 0.0
  %1536 = vmatmul.mubr.f32.gmra.mrb[0].mxu0 %v443
  %v1537 = vpop.f32.mrb[0].mxu0
  %v1538 = vadd.f32 %v1353, %v1537
  %v1539 = vpop.f32.mrb[0].mxu0
  %1540 = vmatprep.mubr.f32.mxu0 0.0
  %1541 = vmatmul.mubr.f32.gmra.mrb[0].mxu0 %v452
  %v1542 = vpop.f32.mrb[0].mxu0
  %v1543 = vadd.f32 %v1358, %v1542
  %v1544 = vpop.f32.mrb[0].mxu0
  %1545 = vmatprep.mubr.f32.mxu0 0.0
  %1546 = vmatmul.mubr.f32.gmra.mrb[0].mxu0 %v461
  %v1547 = vpop.f32.mrb[0].mxu0
  %v1548 = vadd.f32 %v1363, %v1547
  %v1549 = vpop.f32.mrb[0].mxu0
  %1550 = vmatprep.mubr.f32.mxu0 0.0
  %1551 = vmatmul.mubr.f32.gmra.mrb[0].mxu0 %v470
  %v1552 = vpop.f32.mrb[0].mxu0
  %v1553 = vadd.f32 %v1368, %v1552
  %v1554 = vpop.f32.mrb[0].mxu0
  %1555 = vmatprep.mubr.f32.mxu0 0.0
  %1556 = vmatmul.mubr.f32.gmra.mrb[0].mxu0 %v479
  %v1557 = vpop.f32.mrb[0].mxu0
  %v1558 = vadd.f32 %v1373, %v1557
  %v1559 = vpop.f32.mrb[0].mxu0
  %1560 = vmatprep.mubr.f32.mxu0 0.0
  %1561 = vmatmul.mubr.f32.gmra.mrb[0].mxu0 %v488
  %v1562 = vpop.f32.mrb[0].mxu0
  %v1563 = vadd.f32 %v1378, %v1562
  %v1564 = vpop.f32.mrb[0].mxu0
  %1565 = vmatprep.mubr.f32.mxu0 0.0
  %1566 = vmatmul.mubr.f32.gmra.mrb[0].mxu0 %v497
  %v1567 = vpop.f32.mrb[0].mxu0
  %v1568 = vadd.f32 %v1383, %v1567
  %v1569 = vpop.f32.mrb[0].mxu0
  %1570 = vmatprep.mubr.f32.mxu0 0.0
  %1571 = vmatmul.mubr.f32.gmra.mrb[0].mxu0 %v506
  %v1572 = vpop.f32.mrb[0].mxu0
  %v1573 = vadd.f32 %v1388, %v1572
  %v1574 = vpop.f32.mrb[0].mxu0
  %1575 = vdwg.mxu0
  %vm1576 = vcmask 400384
  %1577 = vst.msk [vmem:[%s3] sm:$0xff] %vm1576, %v1458
  %1578 = vst.msk [vmem:[%s3 + $0x8] sm:$0xff] %vm1576, %v1463
  %1579 = vst.msk [vmem:[%s3 + $0x10] sm:$0xff] %vm1576, %v1468
  %1580 = vst.msk [vmem:[%s3 + $0x18] sm:$0xff] %vm1576, %v1473
  %1581 = vst.msk [vmem:[%s3 + $0x20] sm:$0xff] %vm1576, %v1478
  %1582 = vst.msk [vmem:[%s3 + $0x28] sm:$0xff] %vm1576, %v1483
  %1583 = vst.msk [vmem:[%s3 + $0x30] sm:$0xff] %vm1576, %v1488
  %1584 = vst.msk [vmem:[%s3 + $0x38] sm:$0xff] %vm1576, %v1493
  %1585 = vst.msk [vmem:[%s3 + $0x40] sm:$0xff] %vm1576, %v1498
  %1586 = vst.msk [vmem:[%s3 + $0x48] sm:$0xff] %vm1576, %v1503
  %1587 = vst.msk [vmem:[%s3 + $0x50] sm:$0xff] %vm1576, %v1508
  %1588 = vst.msk [vmem:[%s3 + $0x58] sm:$0xff] %vm1576, %v1513
  %1589 = vst.msk [vmem:[%s3 + $0x60] sm:$0xff] %vm1576, %v1518
  %1590 = vst.msk [vmem:[%s3 + $0x68] sm:$0xff] %vm1576, %v1523
  %1591 = vst.msk [vmem:[%s3 + $0x70] sm:$0xff] %vm1576, %v1528
  %1592 = vst.msk [vmem:[%s3 + $0x78] sm:$0xff] %vm1576, %v1533
  %1593 = vst.msk [vmem:[%s3 + $0x80] sm:$0xff] %vm1576, %v1538
  %1594 = vst.msk [vmem:[%s3 + $0x88] sm:$0xff] %vm1576, %v1543
  %1595 = vst.msk [vmem:[%s3 + $0x90] sm:$0xff] %vm1576, %v1548
  %1596 = vst.msk [vmem:[%s3 + $0x98] sm:$0xff] %vm1576, %v1553
  %1597 = vst.msk [vmem:[%s3 + $0xa0] sm:$0xff] %vm1576, %v1558
  %1598 = vst.msk [vmem:[%s3 + $0xa8] sm:$0xff] %vm1576, %v1563
  %1599 = vst.msk [vmem:[%s3 + $0xb0] sm:$0xff] %vm1576, %v1568
  %1600 = vst.msk [vmem:[%s3 + $0xb8] sm:$0xff] %vm1576, %v1573
  // Predicated region
  $region14: #{gated_pointwise_conv.1} parent=0 // pred_check
    _
  $region15: #{gated_pointwise_conv.1} parent=0 // pred_check_branch
    %1602 = sbr.rel (0) target = $region17
  $region16: #{gated_pointwise_conv.1} parent=0 // pred_region
    _
  $region17: #{gated_pointwise_conv.1} parent=0 // pred_fallthru
    _
  // Predicated region
  $region18: #{gated_pointwise_conv.1} parent=0 // pred_check
    _
  $region19: #{gated_pointwise_conv.1} parent=0 // pred_check_branch
    %1604 = sbr.rel (0) target = $region21
  $region20: #{gated_pointwise_conv.1} parent=0 // pred_region
    _
  $region21: #{gated_pointwise_conv.1} parent=0 // pred_fallthru
    _

</llo_original>
